<compile_context>
chip_gen: v5e
topology: v5e:2x2
jax: 0.10.0
libtpu: 0.0.40
codegen_flags: <defaults>
</compile_context>

<pallas_src>
import functools

import jax
import jax.numpy as jnp
from jax.experimental import pallas as pl
from jax.experimental.pallas import tpu as pltpu

RM = 1.0
DT = 1.0
B0 = 0.01
BETA = 1.8


def _round_up(x, m):
    return (x + m - 1) // m * m


def _pick_time_chunk(T, max_chunk=16):
    """Largest divisor of T that is <= max_chunk (falls back to 1 for prime T)."""
    best = 1
    for c in range(2, min(T, max_chunk) + 1):
        if T % c == 0:
            best = c
    return best


def _eib_seq_kernel(x_ref,        # (Tc, bt, P)  bf16  inputs for this time chunk
                    w_ih_ref,     # (P, Np)      bf16  |W_ih|*mask, pre-transposed
                    b_ih_ref,     # (1, Np)      f32
                    w_hh_ref,     # (Np, Np)     bf16  |W_hh|*mask, pre-transposed
                    b_hh_ref,     # (1, Np)      f32
                    alpha_ref,    # (1, Np)      f32   exp(-dt/tau_m)
                    kappa_ref,    # (1, Np)      f32   (1-alpha)*Rm
                    rho_ref,      # (1, Np)      f32   exp(-dt/tau_adp)
                    omr_ref,      # (1, Np)      f32   1-rho
                    sign_ref,     # (1, Np)      f32   +1 exc / -1 inh / 0 pad
                    spikes_ref,   # (Tc, bt, Np) bf16  out: signed spikes
                    u_ref,        # (bt, Np)     f32   out + state carrier across chunks
                    eta_ref,      # (bt, Np)     f32   out + state carrier across chunks
                    h_last_sc):   # (bt, Np)     bf16  scratch: previous signed spikes
    c = pl.program_id(1)          # time-chunk index
    tc = x_ref.shape[0]

    # reset_state(): h_last = u = eta = 0 at the start of every batch tile's rollout.
    @pl.when(c == 0)
    def _init():
        u_ref[...] = jnp.zeros_like(u_ref)
        eta_ref[...] = jnp.zeros_like(eta_ref)
        h_last_sc[...] = jnp.zeros_like(h_last_sc)

    # Grid-invariant operands: loaded once for the whole chunk.
    w_ih, w_hh = w_ih_ref[...], w_hh_ref[...]
    b_ih, b_hh = b_ih_ref[...], b_hh_ref[...]
    alpha, kappa = alpha_ref[...], kappa_ref[...]
    rho, omr = rho_ref[...], omr_ref[...]
    sign = sign_ref[...]
    t0 = c * tc

    def step(i, carry):
        u, eta, h_last = carry
        # synapse_ih: x @ (|W_ih|*mask_ih)^T + b_ih  (constraint/mask/transpose folded outside)
        h = jax.lax.dot_general(x_ref[i], w_ih, (((1,), (0,)), ((), ())),
                                preferred_element_type=jnp.float32) + b_ih
        # synapse_hh on previous signed spikes; h_last is zero at t == 0 so the matmul
        # contributes nothing then -- only b_hh needs the "if self.h_last is not 0" gate.
        h = h + jax.lax.dot_general(h_last.astype(w_hh.dtype), w_hh, (((1,), (0,)), ((), ())),
                                    preferred_element_type=jnp.float32)
        h = h + (t0 + i > 0).astype(jnp.float32) * b_hh
        # AdaptiveLIF with MultiGaussian.forward (hard step).
        u = u * alpha + kappa * h
        vth = B0 + BETA * eta
        spk = (u - vth >= 0.0).astype(jnp.float32)
        u = u - spk * (eta * BETA + B0)
        eta = rho * eta + omr * spk
        signed = (spk * sign).astype(spikes_ref.dtype)   # exactly 0/+-1 -> bf16 lossless
        spikes_ref[i] = signed
        return u, eta, signed

    carry0 = (u_ref[...], eta_ref[...], h_last_sc[...])
    u_f, eta_f, h_f = jax.lax.fori_loop(0, tc, step, carry0, unroll=True)
    u_ref[...] = u_f
    eta_ref[...] = eta_f
    h_last_sc[...] = h_f


@functools.partial(jax.jit, static_argnames=("n_excitatory", "batch_tile", "time_chunk"))
def eib_forward_sequence(x_seq, eff, *, n_excitatory, batch_tile=None, time_chunk=None):
    """Run T recurrent steps of the ExcitatoryInhibitoryBlock starting from reset_state().

    x_seq: (T, B, P) f32.  eff: dict from make_effective_params.
    Returns ((spikes_exc (T,B,nE), spikes_inh (T,B,nI)),
             (h_last (B,N), u (B,N), eta (B,N)))  -- state after the last step.
    On v7x pass batch_tile ~= round_up(Bp // 2, 16) so the "parallel" axis spans both cores.
    """
    T, B, P = x_seq.shape
    N = eff["b_ih"].shape[-1]
    wdt = eff["w_ih_t"].dtype
    wbytes = jnp.dtype(wdt).itemsize

    Bp = _round_up(B, 16)          # 16 sublanes -> fully packed bf16 MXU LHS tile
    Np = _round_up(N, 128)         # lane-dense neuron axis
    bt = Bp if batch_tile is None else batch_tile
    if bt % 16 != 0 or Bp % bt != 0:
        raise ValueError(f"batch_tile must be a multiple of 16 dividing padded batch {Bp}")
    nb = Bp // bt
    tc = _pick_time_chunk(T) if time_chunk is None else time_chunk
    if T % tc != 0:
        raise ValueError(f"time_chunk must divide T={T}, got {tc}")
    nt = T // tc

    # zero-pad: padded neurons have zero weights/bias/sign, never spike, never feed back;
    # padded batch rows are independent and sliced away.
    x_pad = jnp.pad(x_seq, ((0, 0), (0, Bp - B), (0, 0))).astype(wdt)
    pad_vec = lambda a: jnp.pad(a, ((0, 0), (0, Np - N)))
    w_ih_t = jnp.pad(eff["w_ih_t"], ((0, 0), (0, Np - N)))
    w_hh_t = jnp.pad(eff["w_hh_t"], ((0, Np - N), (0, Np - N)))
    b_ih, b_hh = pad_vec(eff["b_ih"]), pad_vec(eff["b_hh"])
    alpha, kappa = pad_vec(eff["alpha"]), pad_vec(eff["kappa"])
    rho, omr = pad_vec(eff["rho"]), pad_vec(eff["one_minus_rho"])
    sign = pad_vec(eff["neuron_sign"])

    resident = pl.Buffered(1)      # grid-invariant blocks: double-buffering is pure VMEM waste
    const_vec = pl.BlockSpec((1, Np), lambda b, t: (0, 0), pipeline_mode=resident)

    # VMEM budget: resident single-buffered weights + const vectors + double-buffered x/spike
    # chunks + state blocks; clamp to the physical VMEM of this device (64 MiB/TC on v7x).
    need = ((P * Np + Np * Np) * wbytes           # resident weights
            + 7 * Np * 4                          # constant (1,Np) vectors
            + 2 * tc * bt * P * wbytes            # x chunk (double-buffered)
            + 2 * tc * bt * Np * 2                # spikes chunk (bf16, double-buffered)
            + 2 * 2 * bt * Np * 4                 # u, eta state blocks
            + bt * Np * 2)                        # h_last scratch
    try:
        vmem_cap = int(pltpu.get_tpu_info().vmem_capacity_bytes)
    except Exception:
        vmem_cap = 64 * 1024 * 1024               # conservative: v7x per-core VMEM
    vmem_limit = int(min(max(int(1.5 * need), 32 * 1024 * 1024), vmem_cap - 2 * 1024 * 1024))
    # TODO(synk): for Np large enough that the resident (Np,Np) w_hh no longer fits (esp. the
    # 64 MiB VMEM of v7x), tile the neuron axis and stream w_hh column blocks; similarly the
    # x @ W_ih projection could be hoisted to one big (T*Bp,P)x(P,Np) matmul outside the kernel.

    spikes_pad, u_pad, eta_pad = pl.pallas_call(
        _eib_seq_kernel,
        grid=(nb, nt),
        in_specs=[
            pl.BlockSpec((tc, bt, P), lambda b, t: (t, b, 0)),                    # x: streamed
            pl.BlockSpec((P, Np), lambda b, t: (0, 0), pipeline_mode=resident),   # weights: resident
            const_vec,
            pl.BlockSpec((Np, Np), lambda b, t: (0, 0), pipeline_mode=resident),
            const_vec, const_vec, const_vec, const_vec, const_vec, const_vec,
        ],
        out_specs=(
            pl.BlockSpec((tc, bt, Np), lambda b, t: (t, b, 0)),  # spikes per chunk
            pl.BlockSpec((bt, Np), lambda b, t: (b, 0)),         # u   (VMEM-resident over t)
            pl.BlockSpec((bt, Np), lambda b, t: (b, 0)),         # eta (VMEM-resident over t)
        ),
        out_shape=(
            jax.ShapeDtypeStruct((T, Bp, Np), jnp.bfloat16),
            jax.ShapeDtypeStruct((Bp, Np), jnp.float32),
            jax.ShapeDtypeStruct((Bp, Np), jnp.float32),
        ),
        scratch_shapes=[
            pltpu.VMEM((bt, Np), jnp.bfloat16),   # h_last (previous signed spikes)
        ],
        compiler_params=pltpu.CompilerParams(
            dimension_semantics=("parallel", "arbitrary"),
            vmem_limit_bytes=vmem_limit,
        ),
    )(x_pad, w_ih_t, b_ih, w_hh_t, b_hh, alpha, kappa, rho, omr, sign)

    spikes = spikes_pad[:, :B, :N].astype(jnp.float32)
    u_final = u_pad[:B, :N]
    eta_final = eta_pad[:B, :N]
    out = (spikes[:, :, :n_excitatory], spikes[:, :, n_excitatory:])
    return out, (spikes[-1], u_final, eta_final)


def make_params(key, n_presynapses, n_neurons, percent, sparsity):
    """Synthetic raw params with the same shapes/semantics as the PyTorch module."""
    kw1, kb1, kw2, kb2, ktm, kta = jax.random.split(key, 6)

    def _linear(kw, kb, out_f, in_f):
        bound = 1.0 / jnp.sqrt(jnp.float32(in_f))
        w = jax.random.uniform(kw, (out_f, in_f), jnp.float32, -bound, bound)
        b = jax.random.uniform(kb, (1, out_f), jnp.float32, -bound, bound)
        # _mask_low_weight(100*(1-sparsity)): keep |w| >= that percentile of |w|.
        pcnt = jnp.percentile(jnp.abs(w), 100.0 * (1.0 - sparsity))
        mask = (jnp.abs(w) >= pcnt).astype(jnp.float32)
        return w, b, mask

    w_ih, b_ih, mask_ih = _linear(kw1, kb1, n_neurons, n_presynapses)
    w_hh, b_hh, mask_hh = _linear(kw2, kb2, n_neurons, n_neurons)

    # clamp so exp(-dt/tau) stays finite for unlucky normal draws (init-only safeguard).
    tau_m = jnp.maximum(200.0 + 25.0 * jax.random.normal(ktm, (1, n_neurons), jnp.float32), 1.0)
    tau_adp = jnp.maximum(20.0 + 5.0 * jax.random.normal(kta, (1, n_neurons), jnp.float32), 1.0)

    n_exc = int(n_neurons * percent)
    sign = jnp.concatenate(
        [jnp.ones((1, n_exc), jnp.float32),
         -jnp.ones((1, n_neurons - n_exc), jnp.float32)], axis=1)
    return {
        "w_ih": w_ih, "mask_ih": mask_ih, "b_ih": b_ih,
        "w_hh": w_hh, "mask_hh": mask_hh, "b_hh": b_hh,
        "tau_m": tau_m, "tau_adp": tau_adp, "neuron_sign": sign,
    }, n_exc


def make_effective_params(raw, weight_dtype=jnp.bfloat16):
    """Fold |W|*mask, pre-transpose to (in,out), cast to bf16, precompute decay constants."""
    w_ih_t = (jnp.abs(raw["w_ih"]) * raw["mask_ih"]).T.astype(weight_dtype)   # (P, N)
    w_hh_t = (jnp.abs(raw["w_hh"]) * raw["mask_hh"]).T.astype(weight_dtype)   # (N, N)
    alpha = jnp.exp(-DT / raw["tau_m"])
    rho = jnp.exp(-DT / raw["tau_adp"])
    return {
        "w_ih_t": w_ih_t, "b_ih": raw["b_ih"],
        "w_hh_t": w_hh_t, "b_hh": raw["b_hh"],
        "alpha": alpha, "kappa": (1.0 - alpha) * RM,
        "rho": rho, "one_minus_rho": 1.0 - rho,
        "neuron_sign": raw["neuron_sign"],
    }


def eib_reference(x_seq, eff):
    """Pure-JAX rollout with identical math/op ordering (sanity check for the kernel)."""
    T, B, _ = x_seq.shape
    N = eff["b_ih"].shape[-1]
    wdt = eff["w_ih_t"].dtype
    w_ih_t, w_hh_t = eff["w_ih_t"], eff["w_hh_t"]
    b_ih, b_hh = eff["b_ih"], eff["b_hh"]
    alpha, kappa = eff["alpha"], eff["kappa"]
    rho, omr = eff["rho"], eff["one_minus_rho"]
    sign = eff["neuron_sign"]

    def step(carry, inp):
        x_t, t = inp
        h_last, u, eta = carry
        h = jnp.dot(x_t.astype(wdt), w_ih_t, preferred_element_type=jnp.float32) + b_ih
        h = h + jnp.dot(h_last.astype(wdt), w_hh_t, preferred_element_type=jnp.float32)
        h = h + (t > 0).astype(jnp.float32) * b_hh
        u = u * alpha + kappa * h
        vth = B0 + BETA * eta
        spk = (u - vth >= 0.0).astype(jnp.float32)
        u = u - spk * (eta * BETA + B0)
        eta = rho * eta + omr * spk
        signed = spk * sign
        return (signed, u, eta), signed

    init = (jnp.zeros((B, N), jnp.float32),) * 3
    (h_last, u, eta), spikes = jax.lax.scan(step, init, (x_seq, jnp.arange(T)))
    return spikes, (h_last, u, eta)


# TODO(synk): training would need a custom_vjp with the MultiGaussian surrogate gradient
#             (forward hard-step only here); the t_max>1 NonNegDelayedSynapse path is not
#             implemented (module's t_max<=1 branch is what this kernel covers).

if __name__ == "__main__":
    # Small shapes: T=8 timesteps, batch=2, n_presynapses=32, n_neurons=64
    T, B, P, N = 8, 2, 32, 64
    percent, sparsity = 0.75, 0.3

    key = jax.random.PRNGKey(0)
    kparam, kx = jax.random.split(key)
    raw, n_exc = make_params(kparam, P, N, percent, sparsity)
    eff = make_effective_params(raw, weight_dtype=jnp.bfloat16)

    x_seq = jax.random.normal(kx, (T, B, P), jnp.float32)

    (exc, inh), (h_last, u_f, eta_f) = eib_forward_sequence(x_seq, eff, n_excitatory=n_exc)
    jax.block_until_ready((exc, inh, h_last, u_f, eta_f))

    assert exc.shape == (T, B, n_exc) and inh.shape == (T, B, N - n_exc)
    assert bool(jnp.all(jnp.isfinite(u_f))) and bool(jnp.all(jnp.isfinite(eta_f)))

    # cross-check against a pure-JAX rollout using the same effective (bf16) params
    spikes_k = jnp.concatenate([exc, inh], axis=-1)
    spikes_r, (h_r, u_r, eta_r) = eib_reference(x_seq, eff)
    assert bool(jnp.allclose(spikes_k, spikes_r, atol=1e-5))
    assert bool(jnp.allclose(u_f, u_r, atol=1e-4))
    assert bool(jnp.allclose(eta_f, eta_r, atol=1e-4))

    print("KERNEL_OK")
</pallas_src>

<mosaic_0001>
module attributes {stable_mosaic.version = 11 : i64} {
  func.func @_eib_seq_kernel(%arg0: i32, %arg1: i32, %arg2: memref<8x16x32xbf16, #tpu.memory_space<vmem>>, %arg3: memref<32x128xbf16, #tpu.memory_space<vmem>>, %arg4: memref<1x128xf32, #tpu.memory_space<vmem>>, %arg5: memref<128x128xbf16, #tpu.memory_space<vmem>>, %arg6: memref<1x128xf32, #tpu.memory_space<vmem>>, %arg7: memref<1x128xf32, #tpu.memory_space<vmem>>, %arg8: memref<1x128xf32, #tpu.memory_space<vmem>>, %arg9: memref<1x128xf32, #tpu.memory_space<vmem>>, %arg10: memref<1x128xf32, #tpu.memory_space<vmem>>, %arg11: memref<1x128xf32, #tpu.memory_space<vmem>>, %arg12: memref<8x16x128xbf16, #tpu.memory_space<vmem>>, %arg13: memref<16x128xf32, #tpu.memory_space<vmem>>, %arg14: memref<16x128xf32, #tpu.memory_space<vmem>>, %arg15: memref<16x128xbf16, #tpu.memory_space<vmem>>) attributes {dimension_semantics = [#tpu.dimension_semantics<parallel>, #tpu.dimension_semantics<arbitrary>], iteration_bounds = array<i64: 1, 1>, scalar_prefetch = 0 : i64, scratch_operands = 1 : i64, tpu.core_type = #tpu.core_type<tc>, window_params = [{transform_indices = @transform_0, window_bounds = array<i64: 8, 16, 32>}, {pipeline_mode = #tpu.pipeline_mode<synchronous>, transform_indices = @transform_1, window_bounds = array<i64: 32, 128>}, {pipeline_mode = #tpu.pipeline_mode<synchronous>, transform_indices = @transform_2, window_bounds = array<i64: 1, 128>}, {pipeline_mode = #tpu.pipeline_mode<synchronous>, transform_indices = @transform_3, window_bounds = array<i64: 128, 128>}, {pipeline_mode = #tpu.pipeline_mode<synchronous>, transform_indices = @transform_4, window_bounds = array<i64: 1, 128>}, {pipeline_mode = #tpu.pipeline_mode<synchronous>, transform_indices = @transform_5, window_bounds = array<i64: 1, 128>}, {pipeline_mode = #tpu.pipeline_mode<synchronous>, transform_indices = @transform_6, window_bounds = array<i64: 1, 128>}, {pipeline_mode = #tpu.pipeline_mode<synchronous>, transform_indices = @transform_7, window_bounds = array<i64: 1, 128>}, {pipeline_mode = #tpu.pipeline_mode<synchronous>, transform_indices = @transform_8, window_bounds = array<i64: 1, 128>}, {pipeline_mode = #tpu.pipeline_mode<synchronous>, transform_indices = @transform_9, window_bounds = array<i64: 1, 128>}, {transform_indices = @transform_10, window_bounds = array<i64: 8, 16, 128>}, {transform_indices = @transform_11, window_bounds = array<i64: 16, 128>}, {transform_indices = @transform_12, window_bounds = array<i64: 16, 128>}]} {
    %c0_i32 = arith.constant 0 : i32
    %0 = arith.cmpi eq, %arg1, %c0_i32 : i32
    %1 = arith.extui %0 : i1 to i32
    %c0_i32_0 = arith.constant 0 : i32
    %2 = arith.cmpi ne, %1, %c0_i32_0 : i32
    scf.if %2 {
      %cst_127 = arith.constant 0.000000e+00 : f32
      %403 = vector.broadcast %cst_127 : f32 to vector<16x128xf32>
      %c0_128 = arith.constant 0 : index
      %c0_129 = arith.constant 0 : index
      %404 = vector.load %arg13[%c0_128, %c0_129] : memref<16x128xf32, #tpu.memory_space<vmem>>, vector<16x128xf32>
      tpu.vector_store %arg13[%c0_128, %c0_129], %403 {strides = array<i32>} : memref<16x128xf32, #tpu.memory_space<vmem>>, vector<16x128xf32>,
      %cst_130 = arith.constant 0.000000e+00 : f32
      %405 = vector.broadcast %cst_130 : f32 to vector<16x128xf32>
      %c0_131 = arith.constant 0 : index
      %c0_132 = arith.constant 0 : index
      %406 = vector.load %arg14[%c0_131, %c0_132] : memref<16x128xf32, #tpu.memory_space<vmem>>, vector<16x128xf32>
      tpu.vector_store %arg14[%c0_131, %c0_132], %405 {strides = array<i32>} : memref<16x128xf32, #tpu.memory_space<vmem>>, vector<16x128xf32>,
      %cst_133 = arith.constant 0.000000e+00 : bf16
      %407 = vector.broadcast %cst_133 : bf16 to vector<16x128xbf16>
      %c0_134 = arith.constant 0 : index
      %c0_135 = arith.constant 0 : index
      %408 = vector.load %arg15[%c0_134, %c0_135] : memref<16x128xbf16, #tpu.memory_space<vmem>>, vector<16x128xbf16>
      tpu.vector_store %arg15[%c0_134, %c0_135], %407 {strides = array<i32>} : memref<16x128xbf16, #tpu.memory_space<vmem>>, vector<16x128xbf16>,
    } else {
    }
    %c0 = arith.constant 0 : index
    %c0_1 = arith.constant 0 : index
    %3 = vector.load %arg3[%c0, %c0_1] : memref<32x128xbf16, #tpu.memory_space<vmem>>, vector<32x128xbf16>
    %c0_2 = arith.constant 0 : index
    %c0_3 = arith.constant 0 : index
    %4 = vector.load %arg5[%c0_2, %c0_3] : memref<128x128xbf16, #tpu.memory_space<vmem>>, vector<128x128xbf16>
    %c0_4 = arith.constant 0 : index
    %c0_5 = arith.constant 0 : index
    %5 = vector.load %arg4[%c0_4, %c0_5] : memref<1x128xf32, #tpu.memory_space<vmem>>, vector<1x128xf32>
    %c0_6 = arith.constant 0 : index
    %c0_7 = arith.constant 0 : index
    %6 = vector.load %arg6[%c0_6, %c0_7] : memref<1x128xf32, #tpu.memory_space<vmem>>, vector<1x128xf32>
    %c0_8 = arith.constant 0 : index
    %c0_9 = arith.constant 0 : index
    %7 = vector.load %arg7[%c0_8, %c0_9] : memref<1x128xf32, #tpu.memory_space<vmem>>, vector<1x128xf32>
    %c0_10 = arith.constant 0 : index
    %c0_11 = arith.constant 0 : index
    %8 = vector.load %arg8[%c0_10, %c0_11] : memref<1x128xf32, #tpu.memory_space<vmem>>, vector<1x128xf32>
    %c0_12 = arith.constant 0 : index
    %c0_13 = arith.constant 0 : index
    %9 = vector.load %arg9[%c0_12, %c0_13] : memref<1x128xf32, #tpu.memory_space<vmem>>, vector<1x128xf32>
    %c0_14 = arith.constant 0 : index
    %c0_15 = arith.constant 0 : index
    %10 = vector.load %arg10[%c0_14, %c0_15] : memref<1x128xf32, #tpu.memory_space<vmem>>, vector<1x128xf32>
    %c0_16 = arith.constant 0 : index
    %c0_17 = arith.constant 0 : index
    %11 = vector.load %arg11[%c0_16, %c0_17] : memref<1x128xf32, #tpu.memory_space<vmem>>, vector<1x128xf32>
    %c8_i32 = arith.constant 8 : i32
    %12 = arith.muli %arg1, %c8_i32 : i32
    %c0_18 = arith.constant 0 : index
    %c0_19 = arith.constant 0 : index
    %13 = vector.load %arg13[%c0_18, %c0_19] : memref<16x128xf32, #tpu.memory_space<vmem>>, vector<16x128xf32>
    %c0_20 = arith.constant 0 : index
    %c0_21 = arith.constant 0 : index
    %14 = vector.load %arg14[%c0_20, %c0_21] : memref<16x128xf32, #tpu.memory_space<vmem>>, vector<16x128xf32>
    %c0_22 = arith.constant 0 : index
    %c0_23 = arith.constant 0 : index
    %15 = vector.load %arg15[%c0_22, %c0_23] : memref<16x128xbf16, #tpu.memory_space<vmem>>, vector<16x128xbf16>
    %c0_i32_24 = arith.constant 0 : i32
    %16 = arith.index_cast %c0_i32_24 : i32 to index
    %c0_25 = arith.constant 0 : index
    %c0_26 = arith.constant 0 : index
    %17 = vector.load %arg2[%16, %c0_25, %c0_26] : memref<8x16x32xbf16, #tpu.memory_space<vmem>>, vector<1x16x32xbf16>
    %18 = vector.shape_cast %17 : vector<1x16x32xbf16> to vector<16x32xbf16>
    %cst = arith.constant dense<0.000000e+00> : vector<16x128xf32>
    %19 = tpu.matmul %18, %3, %cst {dimension_numbers = #tpu.dot_dimension_numbers<[1], [0], [0], [1], [0, 0, 1, 1], [], []>} : vector<16x32xbf16>, vector<32x128xbf16>, vector<16x128xf32> -> vector<16x128xf32>
    %20 = vector.broadcast %5 : vector<1x128xf32> to vector<16x128xf32>
    %21 = arith.addf %19, %20 : vector<16x128xf32>
    %cst_27 = arith.constant dense<0.000000e+00> : vector<16x128xf32>
    %22 = tpu.matmul %15, %4, %cst_27 {dimension_numbers = #tpu.dot_dimension_numbers<[1], [0], [0], [1], [0, 0, 1, 1], [], []>} : vector<16x128xbf16>, vector<128x128xbf16>, vector<16x128xf32> -> vector<16x128xf32>
    %23 = arith.addf %21, %22 : vector<16x128xf32>
    %24 = arith.addi %12, %c0_i32_24 : i32
    %c0_i32_28 = arith.constant 0 : i32
    %25 = arith.cmpi sgt, %24, %c0_i32_28 : i32
    %26 = arith.extui %25 : i1 to i32
    %27 = arith.sitofp %26 : i32 to f32
    %28 = vector.broadcast %27 : f32 to vector<1x128xf32>
    %29 = arith.mulf %28, %6 : vector<1x128xf32>
    %30 = vector.broadcast %29 : vector<1x128xf32> to vector<16x128xf32>
    %31 = arith.addf %23, %30 : vector<16x128xf32>
    %32 = vector.broadcast %7 : vector<1x128xf32> to vector<16x128xf32>
    %33 = arith.mulf %13, %32 : vector<16x128xf32>
    %34 = vector.broadcast %8 : vector<1x128xf32> to vector<16x128xf32>
    %35 = arith.mulf %34, %31 : vector<16x128xf32>
    %36 = arith.addf %33, %35 : vector<16x128xf32>
    %cst_29 = arith.constant 1.800000e+00 : f32
    %37 = vector.broadcast %cst_29 : f32 to vector<16x128xf32>
    %38 = arith.mulf %37, %14 : vector<16x128xf32>
    %cst_30 = arith.constant 0.00999999977 : f32
    %39 = vector.broadcast %cst_30 : f32 to vector<16x128xf32>
    %40 = arith.addf %39, %38 : vector<16x128xf32>
    %41 = arith.subf %36, %40 : vector<16x128xf32>
    %cst_31 = arith.constant 0.000000e+00 : f32
    %42 = vector.broadcast %cst_31 : f32 to vector<16x128xf32>
    %43 = arith.cmpf oge, %41, %42 : vector<16x128xf32>
    %44 = arith.extui %43 : vector<16x128xi1> to vector<16x128xi32>
    %45 = arith.sitofp %44 : vector<16x128xi32> to vector<16x128xf32>
    %cst_32 = arith.constant 1.800000e+00 : f32
    %46 = vector.broadcast %cst_32 : f32 to vector<16x128xf32>
    %47 = arith.mulf %14, %46 : vector<16x128xf32>
    %cst_33 = arith.constant 0.00999999977 : f32
    %48 = vector.broadcast %cst_33 : f32 to vector<16x128xf32>
    %49 = arith.addf %47, %48 : vector<16x128xf32>
    %50 = arith.mulf %45, %49 : vector<16x128xf32>
    %51 = arith.subf %36, %50 : vector<16x128xf32>
    %52 = vector.broadcast %9 : vector<1x128xf32> to vector<16x128xf32>
    %53 = arith.mulf %52, %14 : vector<16x128xf32>
    %54 = vector.broadcast %10 : vector<1x128xf32> to vector<16x128xf32>
    %55 = arith.mulf %54, %45 : vector<16x128xf32>
    %56 = arith.addf %53, %55 : vector<16x128xf32>
    %57 = vector.broadcast %11 : vector<1x128xf32> to vector<16x128xf32>
    %58 = arith.mulf %45, %57 : vector<16x128xf32>
    %59 = arith.truncf %58 : vector<16x128xf32> to vector<16x128xbf16>
    %60 = arith.index_cast %c0_i32_24 : i32 to index
    %c0_34 = arith.constant 0 : index
    %c0_35 = arith.constant 0 : index
    %61 = vector.load %arg12[%60, %c0_34, %c0_35] : memref<8x16x128xbf16, #tpu.memory_space<vmem>>, vector<1x16x128xbf16>
    %62 = vector.shape_cast %61 : vector<1x16x128xbf16> to vector<16x128xbf16>
    %63 = vector.shape_cast %59 : vector<16x128xbf16> to vector<1x16x128xbf16>
    tpu.vector_store %arg12[%60, %c0_34, %c0_35], %63 {strides = array<i32>} : memref<8x16x128xbf16, #tpu.memory_space<vmem>>, vector<1x16x128xbf16>,
    %c1_i32 = arith.constant 1 : i32
    %64 = arith.index_cast %c1_i32 : i32 to index
    %c0_36 = arith.constant 0 : index
    %c0_37 = arith.constant 0 : index
    %65 = vector.load %arg2[%64, %c0_36, %c0_37] : memref<8x16x32xbf16, #tpu.memory_space<vmem>>, vector<1x16x32xbf16>
    %66 = vector.shape_cast %65 : vector<1x16x32xbf16> to vector<16x32xbf16>
    %cst_38 = arith.constant dense<0.000000e+00> : vector<16x128xf32>
    %67 = tpu.matmul %66, %3, %cst_38 {dimension_numbers = #tpu.dot_dimension_numbers<[1], [0], [0], [1], [0, 0, 1, 1], [], []>} : vector<16x32xbf16>, vector<32x128xbf16>, vector<16x128xf32> -> vector<16x128xf32>
    %68 = vector.broadcast %5 : vector<1x128xf32> to vector<16x128xf32>
    %69 = arith.addf %67, %68 : vector<16x128xf32>
    %cst_39 = arith.constant dense<0.000000e+00> : vector<16x128xf32>
    %70 = tpu.matmul %59, %4, %cst_39 {dimension_numbers = #tpu.dot_dimension_numbers<[1], [0], [0], [1], [0, 0, 1, 1], [], []>} : vector<16x128xbf16>, vector<128x128xbf16>, vector<16x128xf32> -> vector<16x128xf32>
    %71 = arith.addf %69, %70 : vector<16x128xf32>
    %72 = arith.addi %12, %c1_i32 : i32
    %c0_i32_40 = arith.constant 0 : i32
    %73 = arith.cmpi sgt, %72, %c0_i32_40 : i32
    %74 = arith.extui %73 : i1 to i32
    %75 = arith.sitofp %74 : i32 to f32
    %76 = vector.broadcast %75 : f32 to vector<1x128xf32>
    %77 = arith.mulf %76, %6 : vector<1x128xf32>
    %78 = vector.broadcast %77 : vector<1x128xf32> to vector<16x128xf32>
    %79 = arith.addf %71, %78 : vector<16x128xf32>
    %80 = vector.broadcast %7 : vector<1x128xf32> to vector<16x128xf32>
    %81 = arith.mulf %51, %80 : vector<16x128xf32>
    %82 = vector.broadcast %8 : vector<1x128xf32> to vector<16x128xf32>
    %83 = arith.mulf %82, %79 : vector<16x128xf32>
    %84 = arith.addf %81, %83 : vector<16x128xf32>
    %cst_41 = arith.constant 1.800000e+00 : f32
    %85 = vector.broadcast %cst_41 : f32 to vector<16x128xf32>
    %86 = arith.mulf %85, %56 : vector<16x128xf32>
    %cst_42 = arith.constant 0.00999999977 : f32
    %87 = vector.broadcast %cst_42 : f32 to vector<16x128xf32>
    %88 = arith.addf %87, %86 : vector<16x128xf32>
    %89 = arith.subf %84, %88 : vector<16x128xf32>
    %cst_43 = arith.constant 0.000000e+00 : f32
    %90 = vector.broadcast %cst_43 : f32 to vector<16x128xf32>
    %91 = arith.cmpf oge, %89, %90 : vector<16x128xf32>
    %92 = arith.extui %91 : vector<16x128xi1> to vector<16x128xi32>
    %93 = arith.sitofp %92 : vector<16x128xi32> to vector<16x128xf32>
    %cst_44 = arith.constant 1.800000e+00 : f32
    %94 = vector.broadcast %cst_44 : f32 to vector<16x128xf32>
    %95 = arith.mulf %56, %94 : vector<16x128xf32>
    %cst_45 = arith.constant 0.00999999977 : f32
    %96 = vector.broadcast %cst_45 : f32 to vector<16x128xf32>
    %97 = arith.addf %95, %96 : vector<16x128xf32>
    %98 = arith.mulf %93, %97 : vector<16x128xf32>
    %99 = arith.subf %84, %98 : vector<16x128xf32>
    %100 = vector.broadcast %9 : vector<1x128xf32> to vector<16x128xf32>
    %101 = arith.mulf %100, %56 : vector<16x128xf32>
    %102 = vector.broadcast %10 : vector<1x128xf32> to vector<16x128xf32>
    %103 = arith.mulf %102, %93 : vector<16x128xf32>
    %104 = arith.addf %101, %103 : vector<16x128xf32>
    %105 = vector.broadcast %11 : vector<1x128xf32> to vector<16x128xf32>
    %106 = arith.mulf %93, %105 : vector<16x128xf32>
    %107 = arith.truncf %106 : vector<16x128xf32> to vector<16x128xbf16>
    %108 = arith.index_cast %c1_i32 : i32 to index
    %c0_46 = arith.constant 0 : index
    %c0_47 = arith.constant 0 : index
    %109 = vector.load %arg12[%108, %c0_46, %c0_47] : memref<8x16x128xbf16, #tpu.memory_space<vmem>>, vector<1x16x128xbf16>
    %110 = vector.shape_cast %109 : vector<1x16x128xbf16> to vector<16x128xbf16>
    %111 = vector.shape_cast %107 : vector<16x128xbf16> to vector<1x16x128xbf16>
    tpu.vector_store %arg12[%108, %c0_46, %c0_47], %111 {strides = array<i32>} : memref<8x16x128xbf16, #tpu.memory_space<vmem>>, vector<1x16x128xbf16>,
    %c2_i32 = arith.constant 2 : i32
    %112 = arith.index_cast %c2_i32 : i32 to index
    %c0_48 = arith.constant 0 : index
    %c0_49 = arith.constant 0 : index
    %113 = vector.load %arg2[%112, %c0_48, %c0_49] : memref<8x16x32xbf16, #tpu.memory_space<vmem>>, vector<1x16x32xbf16>
    %114 = vector.shape_cast %113 : vector<1x16x32xbf16> to vector<16x32xbf16>
    %cst_50 = arith.constant dense<0.000000e+00> : vector<16x128xf32>
    %115 = tpu.matmul %114, %3, %cst_50 {dimension_numbers = #tpu.dot_dimension_numbers<[1], [0], [0], [1], [0, 0, 1, 1], [], []>} : vector<16x32xbf16>, vector<32x128xbf16>, vector<16x128xf32> -> vector<16x128xf32>
    %116 = vector.broadcast %5 : vector<1x128xf32> to vector<16x128xf32>
    %117 = arith.addf %115, %116 : vector<16x128xf32>
    %cst_51 = arith.constant dense<0.000000e+00> : vector<16x128xf32>
    %118 = tpu.matmul %107, %4, %cst_51 {dimension_numbers = #tpu.dot_dimension_numbers<[1], [0], [0], [1], [0, 0, 1, 1], [], []>} : vector<16x128xbf16>, vector<128x128xbf16>, vector<16x128xf32> -> vector<16x128xf32>
    %119 = arith.addf %117, %118 : vector<16x128xf32>
    %120 = arith.addi %12, %c2_i32 : i32
    %c0_i32_52 = arith.constant 0 : i32
    %121 = arith.cmpi sgt, %120, %c0_i32_52 : i32
    %122 = arith.extui %121 : i1 to i32
    %123 = arith.sitofp %122 : i32 to f32
    %124 = vector.broadcast %123 : f32 to vector<1x128xf32>
    %125 = arith.mulf %124, %6 : vector<1x128xf32>
    %126 = vector.broadcast %125 : vector<1x128xf32> to vector<16x128xf32>
    %127 = arith.addf %119, %126 : vector<16x128xf32>
    %128 = vector.broadcast %7 : vector<1x128xf32> to vector<16x128xf32>
    %129 = arith.mulf %99, %128 : vector<16x128xf32>
    %130 = vector.broadcast %8 : vector<1x128xf32> to vector<16x128xf32>
    %131 = arith.mulf %130, %127 : vector<16x128xf32>
    %132 = arith.addf %129, %131 : vector<16x128xf32>
    %cst_53 = arith.constant 1.800000e+00 : f32
    %133 = vector.broadcast %cst_53 : f32 to vector<16x128xf32>
    %134 = arith.mulf %133, %104 : vector<16x128xf32>
    %cst_54 = arith.constant 0.00999999977 : f32
    %135 = vector.broadcast %cst_54 : f32 to vector<16x128xf32>
    %136 = arith.addf %135, %134 : vector<16x128xf32>
    %137 = arith.subf %132, %136 : vector<16x128xf32>
    %cst_55 = arith.constant 0.000000e+00 : f32
    %138 = vector.broadcast %cst_55 : f32 to vector<16x128xf32>
    %139 = arith.cmpf oge, %137, %138 : vector<16x128xf32>
    %140 = arith.extui %139 : vector<16x128xi1> to vector<16x128xi32>
    %141 = arith.sitofp %140 : vector<16x128xi32> to vector<16x128xf32>
    %cst_56 = arith.constant 1.800000e+00 : f32
    %142 = vector.broadcast %cst_56 : f32 to vector<16x128xf32>
    %143 = arith.mulf %104, %142 : vector<16x128xf32>
    %cst_57 = arith.constant 0.00999999977 : f32
    %144 = vector.broadcast %cst_57 : f32 to vector<16x128xf32>
    %145 = arith.addf %143, %144 : vector<16x128xf32>
    %146 = arith.mulf %141, %145 : vector<16x128xf32>
    %147 = arith.subf %132, %146 : vector<16x128xf32>
    %148 = vector.broadcast %9 : vector<1x128xf32> to vector<16x128xf32>
    %149 = arith.mulf %148, %104 : vector<16x128xf32>
    %150 = vector.broadcast %10 : vector<1x128xf32> to vector<16x128xf32>
    %151 = arith.mulf %150, %141 : vector<16x128xf32>
    %152 = arith.addf %149, %151 : vector<16x128xf32>
    %153 = vector.broadcast %11 : vector<1x128xf32> to vector<16x128xf32>
    %154 = arith.mulf %141, %153 : vector<16x128xf32>
    %155 = arith.truncf %154 : vector<16x128xf32> to vector<16x128xbf16>
    %156 = arith.index_cast %c2_i32 : i32 to index
    %c0_58 = arith.constant 0 : index
    %c0_59 = arith.constant 0 : index
    %157 = vector.load %arg12[%156, %c0_58, %c0_59] : memref<8x16x128xbf16, #tpu.memory_space<vmem>>, vector<1x16x128xbf16>
    %158 = vector.shape_cast %157 : vector<1x16x128xbf16> to vector<16x128xbf16>
    %159 = vector.shape_cast %155 : vector<16x128xbf16> to vector<1x16x128xbf16>
    tpu.vector_store %arg12[%156, %c0_58, %c0_59], %159 {strides = array<i32>} : memref<8x16x128xbf16, #tpu.memory_space<vmem>>, vector<1x16x128xbf16>,
    %c3_i32 = arith.constant 3 : i32
    %160 = arith.index_cast %c3_i32 : i32 to index
    %c0_60 = arith.constant 0 : index
    %c0_61 = arith.constant 0 : index
    %161 = vector.load %arg2[%160, %c0_60, %c0_61] : memref<8x16x32xbf16, #tpu.memory_space<vmem>>, vector<1x16x32xbf16>
    %162 = vector.shape_cast %161 : vector<1x16x32xbf16> to vector<16x32xbf16>
    %cst_62 = arith.constant dense<0.000000e+00> : vector<16x128xf32>
    %163 = tpu.matmul %162, %3, %cst_62 {dimension_numbers = #tpu.dot_dimension_numbers<[1], [0], [0], [1], [0, 0, 1, 1], [], []>} : vector<16x32xbf16>, vector<32x128xbf16>, vector<16x128xf32> -> vector<16x128xf32>
    %164 = vector.broadcast %5 : vector<1x128xf32> to vector<16x128xf32>
    %165 = arith.addf %163, %164 : vector<16x128xf32>
    %cst_63 = arith.constant dense<0.000000e+00> : vector<16x128xf32>
    %166 = tpu.matmul %155, %4, %cst_63 {dimension_numbers = #tpu.dot_dimension_numbers<[1], [0], [0], [1], [0, 0, 1, 1], [], []>} : vector<16x128xbf16>, vector<128x128xbf16>, vector<16x128xf32> -> vector<16x128xf32>
    %167 = arith.addf %165, %166 : vector<16x128xf32>
    %168 = arith.addi %12, %c3_i32 : i32
    %c0_i32_64 = arith.constant 0 : i32
    %169 = arith.cmpi sgt, %168, %c0_i32_64 : i32
    %170 = arith.extui %169 : i1 to i32
    %171 = arith.sitofp %170 : i32 to f32
    %172 = vector.broadcast %171 : f32 to vector<1x128xf32>
    %173 = arith.mulf %172, %6 : vector<1x128xf32>
    %174 = vector.broadcast %173 : vector<1x128xf32> to vector<16x128xf32>
    %175 = arith.addf %167, %174 : vector<16x128xf32>
    %176 = vector.broadcast %7 : vector<1x128xf32> to vector<16x128xf32>
    %177 = arith.mulf %147, %176 : vector<16x128xf32>
    %178 = vector.broadcast %8 : vector<1x128xf32> to vector<16x128xf32>
    %179 = arith.mulf %178, %175 : vector<16x128xf32>
    %180 = arith.addf %177, %179 : vector<16x128xf32>
    %cst_65 = arith.constant 1.800000e+00 : f32
    %181 = vector.broadcast %cst_65 : f32 to vector<16x128xf32>
    %182 = arith.mulf %181, %152 : vector<16x128xf32>
    %cst_66 = arith.constant 0.00999999977 : f32
    %183 = vector.broadcast %cst_66 : f32 to vector<16x128xf32>
    %184 = arith.addf %183, %182 : vector<16x128xf32>
    %185 = arith.subf %180, %184 : vector<16x128xf32>
    %cst_67 = arith.constant 0.000000e+00 : f32
    %186 = vector.broadcast %cst_67 : f32 to vector<16x128xf32>
    %187 = arith.cmpf oge, %185, %186 : vector<16x128xf32>
    %188 = arith.extui %187 : vector<16x128xi1> to vector<16x128xi32>
    %189 = arith.sitofp %188 : vector<16x128xi32> to vector<16x128xf32>
    %cst_68 = arith.constant 1.800000e+00 : f32
    %190 = vector.broadcast %cst_68 : f32 to vector<16x128xf32>
    %191 = arith.mulf %152, %190 : vector<16x128xf32>
    %cst_69 = arith.constant 0.00999999977 : f32
    %192 = vector.broadcast %cst_69 : f32 to vector<16x128xf32>
    %193 = arith.addf %191, %192 : vector<16x128xf32>
    %194 = arith.mulf %189, %193 : vector<16x128xf32>
    %195 = arith.subf %180, %194 : vector<16x128xf32>
    %196 = vector.broadcast %9 : vector<1x128xf32> to vector<16x128xf32>
    %197 = arith.mulf %196, %152 : vector<16x128xf32>
    %198 = vector.broadcast %10 : vector<1x128xf32> to vector<16x128xf32>
    %199 = arith.mulf %198, %189 : vector<16x128xf32>
    %200 = arith.addf %197, %199 : vector<16x128xf32>
    %201 = vector.broadcast %11 : vector<1x128xf32> to vector<16x128xf32>
    %202 = arith.mulf %189, %201 : vector<16x128xf32>
    %203 = arith.truncf %202 : vector<16x128xf32> to vector<16x128xbf16>
    %204 = arith.index_cast %c3_i32 : i32 to index
    %c0_70 = arith.constant 0 : index
    %c0_71 = arith.constant 0 : index
    %205 = vector.load %arg12[%204, %c0_70, %c0_71] : memref<8x16x128xbf16, #tpu.memory_space<vmem>>, vector<1x16x128xbf16>
    %206 = vector.shape_cast %205 : vector<1x16x128xbf16> to vector<16x128xbf16>
    %207 = vector.shape_cast %203 : vector<16x128xbf16> to vector<1x16x128xbf16>
    tpu.vector_store %arg12[%204, %c0_70, %c0_71], %207 {strides = array<i32>} : memref<8x16x128xbf16, #tpu.memory_space<vmem>>, vector<1x16x128xbf16>,
    %c4_i32 = arith.constant 4 : i32
    %208 = arith.index_cast %c4_i32 : i32 to index
    %c0_72 = arith.constant 0 : index
    %c0_73 = arith.constant 0 : index
    %209 = vector.load %arg2[%208, %c0_72, %c0_73] : memref<8x16x32xbf16, #tpu.memory_space<vmem>>, vector<1x16x32xbf16>
    %210 = vector.shape_cast %209 : vector<1x16x32xbf16> to vector<16x32xbf16>
    %cst_74 = arith.constant dense<0.000000e+00> : vector<16x128xf32>
    %211 = tpu.matmul %210, %3, %cst_74 {dimension_numbers = #tpu.dot_dimension_numbers<[1], [0], [0], [1], [0, 0, 1, 1], [], []>} : vector<16x32xbf16>, vector<32x128xbf16>, vector<16x128xf32> -> vector<16x128xf32>
    %212 = vector.broadcast %5 : vector<1x128xf32> to vector<16x128xf32>
    %213 = arith.addf %211, %212 : vector<16x128xf32>
    %cst_75 = arith.constant dense<0.000000e+00> : vector<16x128xf32>
    %214 = tpu.matmul %203, %4, %cst_75 {dimension_numbers = #tpu.dot_dimension_numbers<[1], [0], [0], [1], [0, 0, 1, 1], [], []>} : vector<16x128xbf16>, vector<128x128xbf16>, vector<16x128xf32> -> vector<16x128xf32>
    %215 = arith.addf %213, %214 : vector<16x128xf32>
    %216 = arith.addi %12, %c4_i32 : i32
    %c0_i32_76 = arith.constant 0 : i32
    %217 = arith.cmpi sgt, %216, %c0_i32_76 : i32
    %218 = arith.extui %217 : i1 to i32
    %219 = arith.sitofp %218 : i32 to f32
    %220 = vector.broadcast %219 : f32 to vector<1x128xf32>
    %221 = arith.mulf %220, %6 : vector<1x128xf32>
    %222 = vector.broadcast %221 : vector<1x128xf32> to vector<16x128xf32>
    %223 = arith.addf %215, %222 : vector<16x128xf32>
    %224 = vector.broadcast %7 : vector<1x128xf32> to vector<16x128xf32>
    %225 = arith.mulf %195, %224 : vector<16x128xf32>
    %226 = vector.broadcast %8 : vector<1x128xf32> to vector<16x128xf32>
    %227 = arith.mulf %226, %223 : vector<16x128xf32>
    %228 = arith.addf %225, %227 : vector<16x128xf32>
    %cst_77 = arith.constant 1.800000e+00 : f32
    %229 = vector.broadcast %cst_77 : f32 to vector<16x128xf32>
    %230 = arith.mulf %229, %200 : vector<16x128xf32>
    %cst_78 = arith.constant 0.00999999977 : f32
    %231 = vector.broadcast %cst_78 : f32 to vector<16x128xf32>
    %232 = arith.addf %231, %230 : vector<16x128xf32>
    %233 = arith.subf %228, %232 : vector<16x128xf32>
    %cst_79 = arith.constant 0.000000e+00 : f32
    %234 = vector.broadcast %cst_79 : f32 to vector<16x128xf32>
    %235 = arith.cmpf oge, %233, %234 : vector<16x128xf32>
    %236 = arith.extui %235 : vector<16x128xi1> to vector<16x128xi32>
    %237 = arith.sitofp %236 : vector<16x128xi32> to vector<16x128xf32>
    %cst_80 = arith.constant 1.800000e+00 : f32
    %238 = vector.broadcast %cst_80 : f32 to vector<16x128xf32>
    %239 = arith.mulf %200, %238 : vector<16x128xf32>
    %cst_81 = arith.constant 0.00999999977 : f32
    %240 = vector.broadcast %cst_81 : f32 to vector<16x128xf32>
    %241 = arith.addf %239, %240 : vector<16x128xf32>
    %242 = arith.mulf %237, %241 : vector<16x128xf32>
    %243 = arith.subf %228, %242 : vector<16x128xf32>
    %244 = vector.broadcast %9 : vector<1x128xf32> to vector<16x128xf32>
    %245 = arith.mulf %244, %200 : vector<16x128xf32>
    %246 = vector.broadcast %10 : vector<1x128xf32> to vector<16x128xf32>
    %247 = arith.mulf %246, %237 : vector<16x128xf32>
    %248 = arith.addf %245, %247 : vector<16x128xf32>
    %249 = vector.broadcast %11 : vector<1x128xf32> to vector<16x128xf32>
    %250 = arith.mulf %237, %249 : vector<16x128xf32>
    %251 = arith.truncf %250 : vector<16x128xf32> to vector<16x128xbf16>
    %252 = arith.index_cast %c4_i32 : i32 to index
    %c0_82 = arith.constant 0 : index
    %c0_83 = arith.constant 0 : index
    %253 = vector.load %arg12[%252, %c0_82, %c0_83] : memref<8x16x128xbf16, #tpu.memory_space<vmem>>, vector<1x16x128xbf16>
    %254 = vector.shape_cast %253 : vector<1x16x128xbf16> to vector<16x128xbf16>
    %255 = vector.shape_cast %251 : vector<16x128xbf16> to vector<1x16x128xbf16>
    tpu.vector_store %arg12[%252, %c0_82, %c0_83], %255 {strides = array<i32>} : memref<8x16x128xbf16, #tpu.memory_space<vmem>>, vector<1x16x128xbf16>,
    %c5_i32 = arith.constant 5 : i32
    %256 = arith.index_cast %c5_i32 : i32 to index
    %c0_84 = arith.constant 0 : index
    %c0_85 = arith.constant 0 : index
    %257 = vector.load %arg2[%256, %c0_84, %c0_85] : memref<8x16x32xbf16, #tpu.memory_space<vmem>>, vector<1x16x32xbf16>
    %258 = vector.shape_cast %257 : vector<1x16x32xbf16> to vector<16x32xbf16>
    %cst_86 = arith.constant dense<0.000000e+00> : vector<16x128xf32>
    %259 = tpu.matmul %258, %3, %cst_86 {dimension_numbers = #tpu.dot_dimension_numbers<[1], [0], [0], [1], [0, 0, 1, 1], [], []>} : vector<16x32xbf16>, vector<32x128xbf16>, vector<16x128xf32> -> vector<16x128xf32>
    %260 = vector.broadcast %5 : vector<1x128xf32> to vector<16x128xf32>
    %261 = arith.addf %259, %260 : vector<16x128xf32>
    %cst_87 = arith.constant dense<0.000000e+00> : vector<16x128xf32>
    %262 = tpu.matmul %251, %4, %cst_87 {dimension_numbers = #tpu.dot_dimension_numbers<[1], [0], [0], [1], [0, 0, 1, 1], [], []>} : vector<16x128xbf16>, vector<128x128xbf16>, vector<16x128xf32> -> vector<16x128xf32>
    %263 = arith.addf %261, %262 : vector<16x128xf32>
    %264 = arith.addi %12, %c5_i32 : i32
    %c0_i32_88 = arith.constant 0 : i32
    %265 = arith.cmpi sgt, %264, %c0_i32_88 : i32
    %266 = arith.extui %265 : i1 to i32
    %267 = arith.sitofp %266 : i32 to f32
    %268 = vector.broadcast %267 : f32 to vector<1x128xf32>
    %269 = arith.mulf %268, %6 : vector<1x128xf32>
    %270 = vector.broadcast %269 : vector<1x128xf32> to vector<16x128xf32>
    %271 = arith.addf %263, %270 : vector<16x128xf32>
    %272 = vector.broadcast %7 : vector<1x128xf32> to vector<16x128xf32>
    %273 = arith.mulf %243, %272 : vector<16x128xf32>
    %274 = vector.broadcast %8 : vector<1x128xf32> to vector<16x128xf32>
    %275 = arith.mulf %274, %271 : vector<16x128xf32>
    %276 = arith.addf %273, %275 : vector<16x128xf32>
    %cst_89 = arith.constant 1.800000e+00 : f32
    %277 = vector.broadcast %cst_89 : f32 to vector<16x128xf32>
    %278 = arith.mulf %277, %248 : vector<16x128xf32>
    %cst_90 = arith.constant 0.00999999977 : f32
    %279 = vector.broadcast %cst_90 : f32 to vector<16x128xf32>
    %280 = arith.addf %279, %278 : vector<16x128xf32>
    %281 = arith.subf %276, %280 : vector<16x128xf32>
    %cst_91 = arith.constant 0.000000e+00 : f32
    %282 = vector.broadcast %cst_91 : f32 to vector<16x128xf32>
    %283 = arith.cmpf oge, %281, %282 : vector<16x128xf32>
    %284 = arith.extui %283 : vector<16x128xi1> to vector<16x128xi32>
    %285 = arith.sitofp %284 : vector<16x128xi32> to vector<16x128xf32>
    %cst_92 = arith.constant 1.800000e+00 : f32
    %286 = vector.broadcast %cst_92 : f32 to vector<16x128xf32>
    %287 = arith.mulf %248, %286 : vector<16x128xf32>
    %cst_93 = arith.constant 0.00999999977 : f32
    %288 = vector.broadcast %cst_93 : f32 to vector<16x128xf32>
    %289 = arith.addf %287, %288 : vector<16x128xf32>
    %290 = arith.mulf %285, %289 : vector<16x128xf32>
    %291 = arith.subf %276, %290 : vector<16x128xf32>
    %292 = vector.broadcast %9 : vector<1x128xf32> to vector<16x128xf32>
    %293 = arith.mulf %292, %248 : vector<16x128xf32>
    %294 = vector.broadcast %10 : vector<1x128xf32> to vector<16x128xf32>
    %295 = arith.mulf %294, %285 : vector<16x128xf32>
    %296 = arith.addf %293, %295 : vector<16x128xf32>
    %297 = vector.broadcast %11 : vector<1x128xf32> to vector<16x128xf32>
    %298 = arith.mulf %285, %297 : vector<16x128xf32>
    %299 = arith.truncf %298 : vector<16x128xf32> to vector<16x128xbf16>
    %300 = arith.index_cast %c5_i32 : i32 to index
    %c0_94 = arith.constant 0 : index
    %c0_95 = arith.constant 0 : index
    %301 = vector.load %arg12[%300, %c0_94, %c0_95] : memref<8x16x128xbf16, #tpu.memory_space<vmem>>, vector<1x16x128xbf16>
    %302 = vector.shape_cast %301 : vector<1x16x128xbf16> to vector<16x128xbf16>
    %303 = vector.shape_cast %299 : vector<16x128xbf16> to vector<1x16x128xbf16>
    tpu.vector_store %arg12[%300, %c0_94, %c0_95], %303 {strides = array<i32>} : memref<8x16x128xbf16, #tpu.memory_space<vmem>>, vector<1x16x128xbf16>,
    %c6_i32 = arith.constant 6 : i32
    %304 = arith.index_cast %c6_i32 : i32 to index
    %c0_96 = arith.constant 0 : index
    %c0_97 = arith.constant 0 : index
    %305 = vector.load %arg2[%304, %c0_96, %c0_97] : memref<8x16x32xbf16, #tpu.memory_space<vmem>>, vector<1x16x32xbf16>
    %306 = vector.shape_cast %305 : vector<1x16x32xbf16> to vector<16x32xbf16>
    %cst_98 = arith.constant dense<0.000000e+00> : vector<16x128xf32>
    %307 = tpu.matmul %306, %3, %cst_98 {dimension_numbers = #tpu.dot_dimension_numbers<[1], [0], [0], [1], [0, 0, 1, 1], [], []>} : vector<16x32xbf16>, vector<32x128xbf16>, vector<16x128xf32> -> vector<16x128xf32>
    %308 = vector.broadcast %5 : vector<1x128xf32> to vector<16x128xf32>
    %309 = arith.addf %307, %308 : vector<16x128xf32>
    %cst_99 = arith.constant dense<0.000000e+00> : vector<16x128xf32>
    %310 = tpu.matmul %299, %4, %cst_99 {dimension_numbers = #tpu.dot_dimension_numbers<[1], [0], [0], [1], [0, 0, 1, 1], [], []>} : vector<16x128xbf16>, vector<128x128xbf16>, vector<16x128xf32> -> vector<16x128xf32>
    %311 = arith.addf %309, %310 : vector<16x128xf32>
    %312 = arith.addi %12, %c6_i32 : i32
    %c0_i32_100 = arith.constant 0 : i32
    %313 = arith.cmpi sgt, %312, %c0_i32_100 : i32
    %314 = arith.extui %313 : i1 to i32
    %315 = arith.sitofp %314 : i32 to f32
    %316 = vector.broadcast %315 : f32 to vector<1x128xf32>
    %317 = arith.mulf %316, %6 : vector<1x128xf32>
    %318 = vector.broadcast %317 : vector<1x128xf32> to vector<16x128xf32>
    %319 = arith.addf %311, %318 : vector<16x128xf32>
    %320 = vector.broadcast %7 : vector<1x128xf32> to vector<16x128xf32>
    %321 = arith.mulf %291, %320 : vector<16x128xf32>
    %322 = vector.broadcast %8 : vector<1x128xf32> to vector<16x128xf32>
    %323 = arith.mulf %322, %319 : vector<16x128xf32>
    %324 = arith.addf %321, %323 : vector<16x128xf32>
    %cst_101 = arith.constant 1.800000e+00 : f32
    %325 = vector.broadcast %cst_101 : f32 to vector<16x128xf32>
    %326 = arith.mulf %325, %296 : vector<16x128xf32>
    %cst_102 = arith.constant 0.00999999977 : f32
    %327 = vector.broadcast %cst_102 : f32 to vector<16x128xf32>
    %328 = arith.addf %327, %326 : vector<16x128xf32>
    %329 = arith.subf %324, %328 : vector<16x128xf32>
    %cst_103 = arith.constant 0.000000e+00 : f32
    %330 = vector.broadcast %cst_103 : f32 to vector<16x128xf32>
    %331 = arith.cmpf oge, %329, %330 : vector<16x128xf32>
    %332 = arith.extui %331 : vector<16x128xi1> to vector<16x128xi32>
    %333 = arith.sitofp %332 : vector<16x128xi32> to vector<16x128xf32>
    %cst_104 = arith.constant 1.800000e+00 : f32
    %334 = vector.broadcast %cst_104 : f32 to vector<16x128xf32>
    %335 = arith.mulf %296, %334 : vector<16x128xf32>
    %cst_105 = arith.constant 0.00999999977 : f32
    %336 = vector.broadcast %cst_105 : f32 to vector<16x128xf32>
    %337 = arith.addf %335, %336 : vector<16x128xf32>
    %338 = arith.mulf %333, %337 : vector<16x128xf32>
    %339 = arith.subf %324, %338 : vector<16x128xf32>
    %340 = vector.broadcast %9 : vector<1x128xf32> to vector<16x128xf32>
    %341 = arith.mulf %340, %296 : vector<16x128xf32>
    %342 = vector.broadcast %10 : vector<1x128xf32> to vector<16x128xf32>
    %343 = arith.mulf %342, %333 : vector<16x128xf32>
    %344 = arith.addf %341, %343 : vector<16x128xf32>
    %345 = vector.broadcast %11 : vector<1x128xf32> to vector<16x128xf32>
    %346 = arith.mulf %333, %345 : vector<16x128xf32>
    %347 = arith.truncf %346 : vector<16x128xf32> to vector<16x128xbf16>
    %348 = arith.index_cast %c6_i32 : i32 to index
    %c0_106 = arith.constant 0 : index
    %c0_107 = arith.constant 0 : index
    %349 = vector.load %arg12[%348, %c0_106, %c0_107] : memref<8x16x128xbf16, #tpu.memory_space<vmem>>, vector<1x16x128xbf16>
    %350 = vector.shape_cast %349 : vector<1x16x128xbf16> to vector<16x128xbf16>
    %351 = vector.shape_cast %347 : vector<16x128xbf16> to vector<1x16x128xbf16>
    tpu.vector_store %arg12[%348, %c0_106, %c0_107], %351 {strides = array<i32>} : memref<8x16x128xbf16, #tpu.memory_space<vmem>>, vector<1x16x128xbf16>,
    %c7_i32 = arith.constant 7 : i32
    %352 = arith.index_cast %c7_i32 : i32 to index
    %c0_108 = arith.constant 0 : index
    %c0_109 = arith.constant 0 : index
    %353 = vector.load %arg2[%352, %c0_108, %c0_109] : memref<8x16x32xbf16, #tpu.memory_space<vmem>>, vector<1x16x32xbf16>
    %354 = vector.shape_cast %353 : vector<1x16x32xbf16> to vector<16x32xbf16>
    %cst_110 = arith.constant dense<0.000000e+00> : vector<16x128xf32>
    %355 = tpu.matmul %354, %3, %cst_110 {dimension_numbers = #tpu.dot_dimension_numbers<[1], [0], [0], [1], [0, 0, 1, 1], [], []>} : vector<16x32xbf16>, vector<32x128xbf16>, vector<16x128xf32> -> vector<16x128xf32>
    %356 = vector.broadcast %5 : vector<1x128xf32> to vector<16x128xf32>
    %357 = arith.addf %355, %356 : vector<16x128xf32>
    %cst_111 = arith.constant dense<0.000000e+00> : vector<16x128xf32>
    %358 = tpu.matmul %347, %4, %cst_111 {dimension_numbers = #tpu.dot_dimension_numbers<[1], [0], [0], [1], [0, 0, 1, 1], [], []>} : vector<16x128xbf16>, vector<128x128xbf16>, vector<16x128xf32> -> vector<16x128xf32>
    %359 = arith.addf %357, %358 : vector<16x128xf32>
    %360 = arith.addi %12, %c7_i32 : i32
    %c0_i32_112 = arith.constant 0 : i32
    %361 = arith.cmpi sgt, %360, %c0_i32_112 : i32
    %362 = arith.extui %361 : i1 to i32
    %363 = arith.sitofp %362 : i32 to f32
    %364 = vector.broadcast %363 : f32 to vector<1x128xf32>
    %365 = arith.mulf %364, %6 : vector<1x128xf32>
    %366 = vector.broadcast %365 : vector<1x128xf32> to vector<16x128xf32>
    %367 = arith.addf %359, %366 : vector<16x128xf32>
    %368 = vector.broadcast %7 : vector<1x128xf32> to vector<16x128xf32>
    %369 = arith.mulf %339, %368 : vector<16x128xf32>
    %370 = vector.broadcast %8 : vector<1x128xf32> to vector<16x128xf32>
    %371 = arith.mulf %370, %367 : vector<16x128xf32>
    %372 = arith.addf %369, %371 : vector<16x128xf32>
    %cst_113 = arith.constant 1.800000e+00 : f32
    %373 = vector.broadcast %cst_113 : f32 to vector<16x128xf32>
    %374 = arith.mulf %373, %344 : vector<16x128xf32>
    %cst_114 = arith.constant 0.00999999977 : f32
    %375 = vector.broadcast %cst_114 : f32 to vector<16x128xf32>
    %376 = arith.addf %375, %374 : vector<16x128xf32>
    %377 = arith.subf %372, %376 : vector<16x128xf32>
    %cst_115 = arith.constant 0.000000e+00 : f32
    %378 = vector.broadcast %cst_115 : f32 to vector<16x128xf32>
    %379 = arith.cmpf oge, %377, %378 : vector<16x128xf32>
    %380 = arith.extui %379 : vector<16x128xi1> to vector<16x128xi32>
    %381 = arith.sitofp %380 : vector<16x128xi32> to vector<16x128xf32>
    %cst_116 = arith.constant 1.800000e+00 : f32
    %382 = vector.broadcast %cst_116 : f32 to vector<16x128xf32>
    %383 = arith.mulf %344, %382 : vector<16x128xf32>
    %cst_117 = arith.constant 0.00999999977 : f32
    %384 = vector.broadcast %cst_117 : f32 to vector<16x128xf32>
    %385 = arith.addf %383, %384 : vector<16x128xf32>
    %386 = arith.mulf %381, %385 : vector<16x128xf32>
    %387 = arith.subf %372, %386 : vector<16x128xf32>
    %388 = vector.broadcast %9 : vector<1x128xf32> to vector<16x128xf32>
    %389 = arith.mulf %388, %344 : vector<16x128xf32>
    %390 = vector.broadcast %10 : vector<1x128xf32> to vector<16x128xf32>
    %391 = arith.mulf %390, %381 : vector<16x128xf32>
    %392 = arith.addf %389, %391 : vector<16x128xf32>
    %393 = vector.broadcast %11 : vector<1x128xf32> to vector<16x128xf32>
    %394 = arith.mulf %381, %393 : vector<16x128xf32>
    %395 = arith.truncf %394 : vector<16x128xf32> to vector<16x128xbf16>
    %396 = arith.index_cast %c7_i32 : i32 to index
    %c0_118 = arith.constant 0 : index
    %c0_119 = arith.constant 0 : index
    %397 = vector.load %arg12[%396, %c0_118, %c0_119] : memref<8x16x128xbf16, #tpu.memory_space<vmem>>, vector<1x16x128xbf16>
    %398 = vector.shape_cast %397 : vector<1x16x128xbf16> to vector<16x128xbf16>
    %399 = vector.shape_cast %395 : vector<16x128xbf16> to vector<1x16x128xbf16>
    tpu.vector_store %arg12[%396, %c0_118, %c0_119], %399 {strides = array<i32>} : memref<8x16x128xbf16, #tpu.memory_space<vmem>>, vector<1x16x128xbf16>,
    %c8_i32_120 = arith.constant 8 : i32
    %c0_121 = arith.constant 0 : index
    %c0_122 = arith.constant 0 : index
    %400 = vector.load %arg13[%c0_121, %c0_122] : memref<16x128xf32, #tpu.memory_space<vmem>>, vector<16x128xf32>
    tpu.vector_store %arg13[%c0_121, %c0_122], %387 {strides = array<i32>} : memref<16x128xf32, #tpu.memory_space<vmem>>, vector<16x128xf32>,
    %c0_123 = arith.constant 0 : index
    %c0_124 = arith.constant 0 : index
    %401 = vector.load %arg14[%c0_123, %c0_124] : memref<16x128xf32, #tpu.memory_space<vmem>>, vector<16x128xf32>
    tpu.vector_store %arg14[%c0_123, %c0_124], %392 {strides = array<i32>} : memref<16x128xf32, #tpu.memory_space<vmem>>, vector<16x128xf32>,
    %c0_125 = arith.constant 0 : index
    %c0_126 = arith.constant 0 : index
    %402 = vector.load %arg15[%c0_125, %c0_126] : memref<16x128xbf16, #tpu.memory_space<vmem>>, vector<16x128xbf16>
    tpu.vector_store %arg15[%c0_125, %c0_126], %395 {strides = array<i32>} : memref<16x128xbf16, #tpu.memory_space<vmem>>, vector<16x128xbf16>,
    return
  }
  func.func @transform_0(%arg0: i32, %arg1: i32) -> (i32, i32, i32) {
    %c0_i32 = arith.constant 0 : i32
    %c0_i32_0 = arith.constant 0 : i32
    return %arg1, %arg0, %c0_i32 : i32, i32, i32
  }
  func.func @transform_1(%arg0: i32, %arg1: i32) -> (i32, i32) {
    %c0_i32 = arith.constant 0 : i32
    %c0_i32_0 = arith.constant 0 : i32
    %c0_i32_1 = arith.constant 0 : i32
    return %c0_i32, %c0_i32_0 : i32, i32
  }
  func.func @transform_2(%arg0: i32, %arg1: i32) -> (i32, i32) {
    %c0_i32 = arith.constant 0 : i32
    %c0_i32_0 = arith.constant 0 : i32
    %c0_i32_1 = arith.constant 0 : i32
    return %c0_i32, %c0_i32_0 : i32, i32
  }
  func.func @transform_3(%arg0: i32, %arg1: i32) -> (i32, i32) {
    %c0_i32 = arith.constant 0 : i32
    %c0_i32_0 = arith.constant 0 : i32
    %c0_i32_1 = arith.constant 0 : i32
    return %c0_i32, %c0_i32_0 : i32, i32
  }
  func.func @transform_4(%arg0: i32, %arg1: i32) -> (i32, i32) {
    %c0_i32 = arith.constant 0 : i32
    %c0_i32_0 = arith.constant 0 : i32
    %c0_i32_1 = arith.constant 0 : i32
    return %c0_i32, %c0_i32_0 : i32, i32
  }
  func.func @transform_5(%arg0: i32, %arg1: i32) -> (i32, i32) {
    %c0_i32 = arith.constant 0 : i32
    %c0_i32_0 = arith.constant 0 : i32
    %c0_i32_1 = arith.constant 0 : i32
    return %c0_i32, %c0_i32_0 : i32, i32
  }
  func.func @transform_6(%arg0: i32, %arg1: i32) -> (i32, i32) {
    %c0_i32 = arith.constant 0 : i32
    %c0_i32_0 = arith.constant 0 : i32
    %c0_i32_1 = arith.constant 0 : i32
    return %c0_i32, %c0_i32_0 : i32, i32
  }
  func.func @transform_7(%arg0: i32, %arg1: i32) -> (i32, i32) {
    %c0_i32 = arith.constant 0 : i32
    %c0_i32_0 = arith.constant 0 : i32
    %c0_i32_1 = arith.constant 0 : i32
    return %c0_i32, %c0_i32_0 : i32, i32
  }
  func.func @transform_8(%arg0: i32, %arg1: i32) -> (i32, i32) {
    %c0_i32 = arith.constant 0 : i32
    %c0_i32_0 = arith.constant 0 : i32
    %c0_i32_1 = arith.constant 0 : i32
    return %c0_i32, %c0_i32_0 : i32, i32
  }
  func.func @transform_9(%arg0: i32, %arg1: i32) -> (i32, i32) {
    %c0_i32 = arith.constant 0 : i32
    %c0_i32_0 = arith.constant 0 : i32
    %c0_i32_1 = arith.constant 0 : i32
    return %c0_i32, %c0_i32_0 : i32, i32
  }
  func.func @transform_10(%arg0: i32, %arg1: i32) -> (i32, i32, i32) {
    %c0_i32 = arith.constant 0 : i32
    %c0_i32_0 = arith.constant 0 : i32
    return %arg1, %arg0, %c0_i32 : i32, i32, i32
  }
  func.func @transform_11(%arg0: i32, %arg1: i32) -> (i32, i32) {
    %c0_i32 = arith.constant 0 : i32
    %c0_i32_0 = arith.constant 0 : i32
    return %arg0, %c0_i32 : i32, i32
  }
  func.func @transform_12(%arg0: i32, %arg1: i32) -> (i32, i32) {
    %c0_i32 = arith.constant 0 : i32
    %c0_i32_0 = arith.constant 0 : i32
    return %arg0, %c0_i32 : i32, i32
  }
}

</mosaic_0001>

<llo_original>
// kernel: eib_forward_sequence.1
$region0: #{eib_forward_sequence.1}
  #allocation0 [shape = 'u32[]', space=smem, size = 0x4, offset = 0x4, fixed_abs, tag = 'smem constant byte address 0x4 - core index']
  #allocation1 [shape = 'u32[72,128]{1,0:T(1,128)}', space=vmem, size = 0x9000, scoped, tag = 'internal scratch']
  #allocation2 [shape = 'bf16[16,128]{1,0:T(8,128)(2,1)}', space=vmem, size = 0x1000, scoped, tag = 'scratch operand']
  %s0 = inlined_call_operand.vmem [shape: bf16[8,16,32], index: 0, kind: input, shape index: {}]
  %s1 = inlined_call_operand.vmem [shape: bf16[32,128], index: 1, kind: input, shape index: {}]
  %s2 = inlined_call_operand.vmem [shape: f32[1,128], index: 2, kind: input, shape index: {}]
  %s3 = inlined_call_operand.vmem [shape: bf16[128,128], index: 3, kind: input, shape index: {}]
  %s4 = inlined_call_operand.vmem [shape: f32[1,128], index: 4, kind: input, shape index: {}]
  %s5 = inlined_call_operand.vmem [shape: f32[1,128], index: 5, kind: input, shape index: {}]
  %s6 = inlined_call_operand.vmem [shape: f32[1,128], index: 6, kind: input, shape index: {}]
  %s7 = inlined_call_operand.vmem [shape: f32[1,128], index: 7, kind: input, shape index: {}]
  %s8 = inlined_call_operand.vmem [shape: f32[1,128], index: 8, kind: input, shape index: {}]
  %s9 = inlined_call_operand.vmem [shape: f32[1,128], index: 9, kind: input, shape index: {}]
  %s10 = inlined_call_operand.vmem [shape: bf16[8,16,128], index: 10, kind: output, shape index: {0}]
  %s11 = inlined_call_operand.vmem [shape: f32[16,128], index: 11, kind: output, shape index: {1}]
  %s12 = inlined_call_operand.vmem [shape: f32[16,128], index: 12, kind: output, shape index: {2}]
  %13 = xla_tuple %s10, %s11, %s12
  %s14 = sld [smem:[#allocation0]]
  $region70: #{eib_forward_sequence.1} parent=0
    _
  %s16 = ssub.s32 1, %s14
  %s17 = scalar_select 0, %s16, %s14
  // Predicated region
  $region2: #{eib_forward_sequence.1} parent=0 // pred_check
    _
  $region3: #{eib_forward_sequence.1} parent=0 // pred_check_branch
    %19 = sbr.rel (0) target = $region5
  $region4: #{eib_forward_sequence.1} parent=0 // pred_region
    _
  $region5: #{eib_forward_sequence.1} parent=0 // pred_fallthru
    _
  // Predicated region
  $region6: #{eib_forward_sequence.1} parent=0 // pred_check
    _
  $region7: #{eib_forward_sequence.1} parent=0 // pred_check_branch
    %21 = sbr.rel (0) target = $region9
  $region8: #{eib_forward_sequence.1} parent=0 // pred_region
    _
  $region9: #{eib_forward_sequence.1} parent=0 // pred_fallthru
    _
  // Predicated region
  $region10: #{eib_forward_sequence.1} parent=0 // pred_check
    _
  $region11: #{eib_forward_sequence.1} parent=0 // pred_check_branch
    %23 = sbr.rel (0) target = $region13
  $region12: #{eib_forward_sequence.1} parent=0 // pred_region
    _
  $region13: #{eib_forward_sequence.1} parent=0 // pred_fallthru
    _
  // Predicated region
  $region14: #{eib_forward_sequence.1} parent=0 // pred_check
    _
  $region15: #{eib_forward_sequence.1} parent=0 // pred_check_branch
    %25 = sbr.rel (0) target = $region17
  $region16: #{eib_forward_sequence.1} parent=0 // pred_region
    _
  $region17: #{eib_forward_sequence.1} parent=0 // pred_fallthru
    _
  // Predicated region
  $region18: #{eib_forward_sequence.1} parent=0 // pred_check
    _
  $region19: #{eib_forward_sequence.1} parent=0 // pred_check_branch
    %27 = sbr.rel (0) target = $region21
  $region20: #{eib_forward_sequence.1} parent=0 // pred_region
    _
  $region21: #{eib_forward_sequence.1} parent=0 // pred_fallthru
    _
  // Predicated region
  $region22: #{eib_forward_sequence.1} parent=0 // pred_check
    _
  $region23: #{eib_forward_sequence.1} parent=0 // pred_check_branch
    %29 = sbr.rel (0) target = $region25
  $region24: #{eib_forward_sequence.1} parent=0 // pred_region
    _
  $region25: #{eib_forward_sequence.1} parent=0 // pred_fallthru
    _
  // Predicated region
  $region26: #{eib_forward_sequence.1} parent=0 // pred_check
    _
  $region27: #{eib_forward_sequence.1} parent=0 // pred_check_branch
    %31 = sbr.rel (0) target = $region29
  $region28: #{eib_forward_sequence.1} parent=0 // pred_region
    _
  $region29: #{eib_forward_sequence.1} parent=0 // pred_fallthru
    _
  // Predicated region
  $region30: #{eib_forward_sequence.1} parent=0 // pred_check
    _
  $region31: #{eib_forward_sequence.1} parent=0 // pred_check_branch
    %33 = sbr.rel (0) target = $region33
  $region32: #{eib_forward_sequence.1} parent=0 // pred_region
    _
  $region33: #{eib_forward_sequence.1} parent=0 // pred_fallthru
    _
  // Predicated region
  $region34: #{eib_forward_sequence.1} parent=0 // pred_check
    _
  $region35: #{eib_forward_sequence.1} parent=0 // pred_check_branch
    %35 = sbr.rel (0) target = $region37
  $region36: #{eib_forward_sequence.1} parent=0 // pred_region
    _
  $region37: #{eib_forward_sequence.1} parent=0 // pred_fallthru
    _
  // Predicated region
  $region38: #{eib_forward_sequence.1} parent=0 // pred_check
    _
  $region39: #{eib_forward_sequence.1} parent=0 // pred_check_branch
    %37 = sbr.rel (0) target = $region41
  $region40: #{eib_forward_sequence.1} parent=0 // pred_region
    _
  $region41: #{eib_forward_sequence.1} parent=0 // pred_fallthru
    _
  %p39 = scmp.eq.s32.totalorder 0, 0
  // Predicated region
  $region42: #{eib_forward_sequence.1} parent=0 // pred_check
    %p40 = pneg %p39
  $region43: #{eib_forward_sequence.1} parent=0 // pred_check_branch
    %42 = sbr.rel (%p40) target = $region45
  $region44: #{eib_forward_sequence.1} parent=0 // pred_region
    %43 = vst [vmem:[%s11] sm:$0xff] 0.0
    %44 = vst [vmem:[%s11 + $0x8] sm:$0xff] 0.0
    %45 = vst [vmem:[%s12] sm:$0xff] 0.0
    %46 = vst [vmem:[%s12 + $0x8] sm:$0xff] 0.0
    %47 = vst [vmem:[#allocation2] sm:$0xf] 0
    %48 = vst [vmem:[#allocation2 + $0x4] sm:$0xf] 0
  $region45: #{eib_forward_sequence.1} parent=0 // pred_fallthru
    _
  %v49 = vld [vmem:[%s1] sm:$0xf]
  %v50 = vld [vmem:[%s1 + $0x4] sm:$0xf]
  %v51 = vld [vmem:[%s1 + $0x8] sm:$0xf]
  %v52 = vld [vmem:[%s1 + $0xc] sm:$0xf]
  %v53 = vld [vmem:[%s3] sm:$0xf]
  %v54 = vld [vmem:[%s3 + $0x4] sm:$0xf]
  %v55 = vld [vmem:[%s3 + $0x8] sm:$0xf]
  %v56 = vld [vmem:[%s3 + $0xc] sm:$0xf]
  %v57 = vld [vmem:[%s3 + $0x10] sm:$0xf]
  %v58 = vld [vmem:[%s3 + $0x14] sm:$0xf]
  %v59 = vld [vmem:[%s3 + $0x18] sm:$0xf]
  %v60 = vld [vmem:[%s3 + $0x1c] sm:$0xf]
  %v61 = vld [vmem:[%s3 + $0x20] sm:$0xf]
  %v62 = vld [vmem:[%s3 + $0x24] sm:$0xf]
  %v63 = vld [vmem:[%s3 + $0x28] sm:$0xf]
  %v64 = vld [vmem:[%s3 + $0x2c] sm:$0xf]
  %v65 = vld [vmem:[%s3 + $0x30] sm:$0xf]
  %v66 = vld [vmem:[%s3 + $0x34] sm:$0xf]
  %v67 = vld [vmem:[%s3 + $0x38] sm:$0xf]
  %v68 = vld [vmem:[%s3 + $0x3c] sm:$0xf]
  %v69 = vld [vmem:[%s2] sm:$0x1]
  %v70 = vld [vmem:[%s4] sm:$0x1]
  %v71 = vld [vmem:[%s5] sm:$0x1]
  %v72 = vld [vmem:[%s6] sm:$0x1]
  %v73 = vld [vmem:[%s7] sm:$0x1]
  %v74 = vld [vmem:[%s8] sm:$0x1]
  %v75 = vld [vmem:[%s9] sm:$0x1]
  %s76 = smul.u32 0, 8
  %v77 = vld [vmem:[%s11] sm:$0xff]
  %v78 = vld [vmem:[%s11 + $0x8] sm:$0xff]
  %v79 = vld [vmem:[%s12] sm:$0xff]
  %v80 = vld [vmem:[%s12 + $0x8] sm:$0xff]
  %v81 = vld [vmem:[#allocation2] sm:$0xf]
  %v82 = vld [vmem:[#allocation2 + $0x4] sm:$0xf]
  %v83 = vld [vmem:[%s0] sm:$0xf]
  %v84 = vld [vmem:[%s0 + $0x4] sm:$0xf]
  %v86 = vperm.slane %v69, 0
  %v90 = vunpack.c.l.b16 %v83
  %v91 = vunpack.c.l.b16 %v84
  %v92 = vpack.c.b16 %v91, %v90
  %v97 = vunpack.c.l.b16 %v49
  %v98 = vunpack.c.l.b16 %v50
  %v99 = vunpack.c.l.b16 %v51
  %v100 = vunpack.c.l.b16 %v52
  %v101 = vpack.c.b16 %v98, %v97
  %v102 = vpack.c.b16 %v100, %v99
  %vm105 = vcmask 261120
  %v107 = vsel %vm105, %v92, 0
  %109 = vmatpush.bf16.msra.mxu0 0
  %110 = vmatpush.bf16.msra.mxu0 0
  %111 = vmatpush.bf16.msra.mxu0 0
  %112 = vmatpush.bf16.msra.mxu0 0
  %113 = vmatpush.bf16.msra.mxu0 0
  %114 = vmatpush.bf16.msra.mxu0 0
  %115 = vmatpush.bf16.msra.mxu0 %v102
  %116 = vmatpush.bf16.msra.mxu0 %v101
  %117 = vmatmul.bf16.gmra.mxu0 %v107
  %v118 = vpop.f32.mrf.mxu0
  %v119 = vadd.f32 %v86, %v118
  %v120 = vpop.f32.mrf.mxu0
  %v121 = vadd.f32 %v86, %v120
  %122 = vdwg.mxu0
  %v125 = vunpack.c.l.b16 %v81
  %v126 = vunpack.c.l.b16 %v82
  %v127 = vpack.c.b16 %v126, %v125
  %v145 = vunpack.c.l.b16 %v53
  %v146 = vunpack.c.l.b16 %v54
  %v147 = vunpack.c.l.b16 %v55
  %v148 = vunpack.c.l.b16 %v56
  %v149 = vunpack.c.l.b16 %v57
  %v150 = vunpack.c.l.b16 %v58
  %v151 = vunpack.c.l.b16 %v59
  %v152 = vunpack.c.l.b16 %v60
  %v153 = vunpack.c.l.b16 %v61
  %v154 = vunpack.c.l.b16 %v62
  %v155 = vunpack.c.l.b16 %v63
  %v156 = vunpack.c.l.b16 %v64
  %v157 = vunpack.c.l.b16 %v65
  %v158 = vunpack.c.l.b16 %v66
  %v159 = vunpack.c.l.b16 %v67
  %v160 = vunpack.c.l.b16 %v68
  %v161 = vpack.c.b16 %v146, %v145
  %v162 = vpack.c.b16 %v148, %v147
  %v163 = vpack.c.b16 %v150, %v149
  %v164 = vpack.c.b16 %v152, %v151
  %v165 = vpack.c.b16 %v154, %v153
  %v166 = vpack.c.b16 %v156, %v155
  %v167 = vpack.c.b16 %v158, %v157
  %v168 = vpack.c.b16 %v160, %v159
  %177 = vmatpush.bf16.msra.mxu0 %v168
  %178 = vmatpush.bf16.msra.mxu0 %v167
  %179 = vmatpush.bf16.msra.mxu0 %v166
  %180 = vmatpush.bf16.msra.mxu0 %v165
  %181 = vmatpush.bf16.msra.mxu0 %v164
  %182 = vmatpush.bf16.msra.mxu0 %v163
  %183 = vmatpush.bf16.msra.mxu0 %v162
  %184 = vmatpush.bf16.msra.mxu0 %v161
  %185 = vmatmul.bf16.gmra.mxu0 %v127
  %v186 = vpop.f32.mrf.mxu0
  %v187 = vadd.f32 0.0, %v186
  %v188 = vpop.f32.mrf.mxu0
  %v189 = vadd.f32 0.0, %v188
  %190 = vdwg.mxu0
  %v191 = vadd.f32 %v119, %v187
  %v192 = vadd.f32 %v121, %v189
  %p193 = scmp.gt.s32.totalorder %s76, 0
  %s194 = scalar_select %p193, 1, 0
  %s195 = scvt.s32.f32 %s194
  %v196 = vstv %s195
  %v197 = vmul.f32 %v196, %v70
  %v199 = vperm.slane %v197, 0
  %v201 = vadd.f32 %v191, %v199
  %v202 = vadd.f32 %v192, %v199
  %v204 = vperm.slane %v71, 0
  %v206 = vmul.f32 %v77, %v204
  %v207 = vmul.f32 %v78, %v204
  %v209 = vperm.slane %v72, 0
  %v211 = vmul.f32 %v209, %v201
  %v212 = vmul.f32 %v209, %v202
  %v213 = vadd.f32 %v206, %v211
  %v214 = vadd.f32 %v207, %v212
  %v215 = vmul.f32 %v79, 1.8
  %v216 = vmul.f32 %v80, 1.8
  %v217 = vadd.f32 %v215, 0.01
  %v218 = vadd.f32 %v216, 0.01
  %v219 = vsub.f32 %v213, %v217
  %v220 = vsub.f32 %v214, %v218
  %vm221 = vcmp.ge.f32.partialorder %v219, 0.0
  %vm222 = vcmp.ge.f32.partialorder %v220, 0.0
  %v223 = vsel %vm221, 1, 0
  %v224 = vsel %vm222, 1, 0
  %v225 = vcvt.s32.f32 %v223
  %v226 = vcvt.s32.f32 %v224
  %v227 = vmul.f32 %v225, %v217
  %v228 = vmul.f32 %v226, %v218
  %v229 = vsub.f32 %v213, %v227
  %v230 = vsub.f32 %v214, %v228
  %v232 = vperm.slane %v73, 0
  %v234 = vmul.f32 %v232, %v79
  %v235 = vmul.f32 %v232, %v80
  %v237 = vperm.slane %v74, 0
  %v239 = vmul.f32 %v237, %v225
  %v240 = vmul.f32 %v237, %v226
  %v241 = vadd.f32 %v234, %v239
  %v242 = vadd.f32 %v235, %v240
  %v244 = vperm.slane %v75, 0
  %v246 = vmul.f32 %v225, %v244
  %v247 = vmul.f32 %v226, %v244
  %v248 = vpack.c.bf16 %v246, %v246
  %v249 = vpack.c.bf16 %v247, %v247
  %250 = vst [vmem:[%s10] sm:$0xf] %v248
  %251 = vst [vmem:[%s10 + $0x4] sm:$0xf] %v249
  %s252 = scalar_lea.vmem %s0, 8
  %v253 = vld [vmem:[%s252] sm:$0xf]
  %v254 = vld [vmem:[%s252 + $0x4] sm:$0xf]
  %v257 = vunpack.c.l.b16 %v253
  %v258 = vunpack.c.l.b16 %v254
  %v259 = vpack.c.b16 %v258, %v257
  %v261 = vsel %vm105, %v259, 0
  %263 = vmatpush.bf16.msra.mxu0 0
  %264 = vmatpush.bf16.msra.mxu0 0
  %265 = vmatpush.bf16.msra.mxu0 0
  %266 = vmatpush.bf16.msra.mxu0 0
  %267 = vmatpush.bf16.msra.mxu0 0
  %268 = vmatpush.bf16.msra.mxu0 0
  %269 = vmatpush.bf16.msra.mxu0 %v102
  %270 = vmatpush.bf16.msra.mxu0 %v101
  %271 = vmatmul.bf16.gmra.mxu0 %v261
  %v272 = vpop.f32.mrf.mxu0
  %v273 = vadd.f32 %v86, %v272
  %v274 = vpop.f32.mrf.mxu0
  %v275 = vadd.f32 %v86, %v274
  %276 = vdwg.mxu0
  %v279 = vunpack.c.l.b16 %v248
  %v280 = vunpack.c.l.b16 %v249
  %v281 = vpack.c.b16 %v280, %v279
  %283 = vmatpush.bf16.msra.mxu0 %v168
  %284 = vmatpush.bf16.msra.mxu0 %v167
  %285 = vmatpush.bf16.msra.mxu0 %v166
  %286 = vmatpush.bf16.msra.mxu0 %v165
  %287 = vmatpush.bf16.msra.mxu0 %v164
  %288 = vmatpush.bf16.msra.mxu0 %v163
  %289 = vmatpush.bf16.msra.mxu0 %v162
  %290 = vmatpush.bf16.msra.mxu0 %v161
  %291 = vmatmul.bf16.gmra.mxu0 %v281
  %v292 = vpop.f32.mrf.mxu0
  %v293 = vadd.f32 0.0, %v292
  %v294 = vpop.f32.mrf.mxu0
  %v295 = vadd.f32 0.0, %v294
  %296 = vdwg.mxu0
  %v297 = vadd.f32 %v273, %v293
  %v298 = vadd.f32 %v275, %v295
  %s299 = sadd.s32 %s76, 1
  %p300 = scmp.gt.s32.totalorder %s299, 0
  %s301 = scalar_select %p300, 1, 0
  %s302 = scvt.s32.f32 %s301
  %v303 = vstv %s302
  %v304 = vmul.f32 %v303, %v70
  %v306 = vperm.slane %v304, 0
  %v308 = vadd.f32 %v297, %v306
  %v309 = vadd.f32 %v298, %v306
  %v310 = vmul.f32 %v229, %v204
  %v311 = vmul.f32 %v230, %v204
  %v312 = vmul.f32 %v209, %v308
  %v313 = vmul.f32 %v209, %v309
  %v314 = vadd.f32 %v310, %v312
  %v315 = vadd.f32 %v311, %v313
  %v316 = vmul.f32 %v241, 1.8
  %v317 = vmul.f32 %v242, 1.8
  %v318 = vadd.f32 %v316, 0.01
  %v319 = vadd.f32 %v317, 0.01
  %v320 = vsub.f32 %v314, %v318
  %v321 = vsub.f32 %v315, %v319
  %vm322 = vcmp.ge.f32.partialorder %v320, 0.0
  %vm323 = vcmp.ge.f32.partialorder %v321, 0.0
  %v324 = vsel %vm322, 1, 0
  %v325 = vsel %vm323, 1, 0
  %v326 = vcvt.s32.f32 %v324
  %v327 = vcvt.s32.f32 %v325
  %v328 = vmul.f32 %v326, %v318
  %v329 = vmul.f32 %v327, %v319
  %v330 = vsub.f32 %v314, %v328
  %v331 = vsub.f32 %v315, %v329
  %v332 = vmul.f32 %v232, %v241
  %v333 = vmul.f32 %v232, %v242
  %v334 = vmul.f32 %v237, %v326
  %v335 = vmul.f32 %v237, %v327
  %v336 = vadd.f32 %v332, %v334
  %v337 = vadd.f32 %v333, %v335
  %v338 = vmul.f32 %v326, %v244
  %v339 = vmul.f32 %v327, %v244
  %v340 = vpack.c.bf16 %v338, %v338
  %v341 = vpack.c.bf16 %v339, %v339
  %s342 = scalar_lea.vmem %s10, 8
  %343 = vst [vmem:[%s342] sm:$0xf] %v340
  %344 = vst [vmem:[%s342 + $0x4] sm:$0xf] %v341
  %s345 = scalar_lea.vmem %s0, 16
  %v346 = vld [vmem:[%s345] sm:$0xf]
  %v347 = vld [vmem:[%s345 + $0x4] sm:$0xf]
  %v350 = vunpack.c.l.b16 %v346
  %v351 = vunpack.c.l.b16 %v347
  %v352 = vpack.c.b16 %v351, %v350
  %v354 = vsel %vm105, %v352, 0
  %356 = vmatpush.bf16.msra.mxu0 0
  %357 = vmatpush.bf16.msra.mxu0 0
  %358 = vmatpush.bf16.msra.mxu0 0
  %359 = vmatpush.bf16.msra.mxu0 0
  %360 = vmatpush.bf16.msra.mxu0 0
  %361 = vmatpush.bf16.msra.mxu0 0
  %362 = vmatpush.bf16.msra.mxu0 %v102
  %363 = vmatpush.bf16.msra.mxu0 %v101
  %364 = vmatmul.bf16.gmra.mxu0 %v354
  %v365 = vpop.f32.mrf.mxu0
  %v366 = vadd.f32 %v86, %v365
  %v367 = vpop.f32.mrf.mxu0
  %v368 = vadd.f32 %v86, %v367
  %369 = vdwg.mxu0
  %v372 = vunpack.c.l.b16 %v340
  %v373 = vunpack.c.l.b16 %v341
  %v374 = vpack.c.b16 %v373, %v372
  %376 = vmatpush.bf16.msra.mxu0 %v168
  %377 = vmatpush.bf16.msra.mxu0 %v167
  %378 = vmatpush.bf16.msra.mxu0 %v166
  %379 = vmatpush.bf16.msra.mxu0 %v165
  %380 = vmatpush.bf16.msra.mxu0 %v164
  %381 = vmatpush.bf16.msra.mxu0 %v163
  %382 = vmatpush.bf16.msra.mxu0 %v162
  %383 = vmatpush.bf16.msra.mxu0 %v161
  %384 = vmatmul.bf16.gmra.mxu0 %v374
  %v385 = vpop.f32.mrf.mxu0
  %v386 = vadd.f32 0.0, %v385
  %v387 = vpop.f32.mrf.mxu0
  %v388 = vadd.f32 0.0, %v387
  %389 = vdwg.mxu0
  %v390 = vadd.f32 %v366, %v386
  %v391 = vadd.f32 %v368, %v388
  %s392 = sadd.s32 %s76, 2
  %p393 = scmp.gt.s32.totalorder %s392, 0
  %s394 = scalar_select %p393, 1, 0
  %s395 = scvt.s32.f32 %s394
  %v396 = vstv %s395
  %v397 = vmul.f32 %v396, %v70
  %v399 = vperm.slane %v397, 0
  %v401 = vadd.f32 %v390, %v399
  %v402 = vadd.f32 %v391, %v399
  %v403 = vmul.f32 %v330, %v204
  %v404 = vmul.f32 %v331, %v204
  %v405 = vmul.f32 %v209, %v401
  %v406 = vmul.f32 %v209, %v402
  %v407 = vadd.f32 %v403, %v405
  %v408 = vadd.f32 %v404, %v406
  %v409 = vmul.f32 %v336, 1.8
  %v410 = vmul.f32 %v337, 1.8
  %v411 = vadd.f32 %v409, 0.01
  %v412 = vadd.f32 %v410, 0.01
  %v413 = vsub.f32 %v407, %v411
  %v414 = vsub.f32 %v408, %v412
  %vm415 = vcmp.ge.f32.partialorder %v413, 0.0
  %vm416 = vcmp.ge.f32.partialorder %v414, 0.0
  %v417 = vsel %vm415, 1, 0
  %v418 = vsel %vm416, 1, 0
  %v419 = vcvt.s32.f32 %v417
  %v420 = vcvt.s32.f32 %v418
  %v421 = vmul.f32 %v419, %v411
  %v422 = vmul.f32 %v420, %v412
  %v423 = vsub.f32 %v407, %v421
  %v424 = vsub.f32 %v408, %v422
  %v425 = vmul.f32 %v232, %v336
  %v426 = vmul.f32 %v232, %v337
  %v427 = vmul.f32 %v237, %v419
  %v428 = vmul.f32 %v237, %v420
  %v429 = vadd.f32 %v425, %v427
  %v430 = vadd.f32 %v426, %v428
  %v431 = vmul.f32 %v419, %v244
  %v432 = vmul.f32 %v420, %v244
  %v433 = vpack.c.bf16 %v431, %v431
  %v434 = vpack.c.bf16 %v432, %v432
  %s435 = scalar_lea.vmem %s10, 16
  %436 = vst [vmem:[%s435] sm:$0xf] %v433
  %437 = vst [vmem:[%s435 + $0x4] sm:$0xf] %v434
  %s438 = scalar_lea.vmem %s0, 24
  %v439 = vld [vmem:[%s438] sm:$0xf]
  %v440 = vld [vmem:[%s438 + $0x4] sm:$0xf]
  %v443 = vunpack.c.l.b16 %v439
  %v444 = vunpack.c.l.b16 %v440
  %v445 = vpack.c.b16 %v444, %v443
  %v447 = vsel %vm105, %v445, 0
  %449 = vmatpush.bf16.msra.mxu0 0
  %450 = vmatpush.bf16.msra.mxu0 0
  %451 = vmatpush.bf16.msra.mxu0 0
  %452 = vmatpush.bf16.msra.mxu0 0
  %453 = vmatpush.bf16.msra.mxu0 0
  %454 = vmatpush.bf16.msra.mxu0 0
  %455 = vmatpush.bf16.msra.mxu0 %v102
  %456 = vmatpush.bf16.msra.mxu0 %v101
  %457 = vmatmul.bf16.gmra.mxu0 %v447
  %v458 = vpop.f32.mrf.mxu0
  %v459 = vadd.f32 %v86, %v458
  %v460 = vpop.f32.mrf.mxu0
  %v461 = vadd.f32 %v86, %v460
  %462 = vdwg.mxu0
  %v465 = vunpack.c.l.b16 %v433
  %v466 = vunpack.c.l.b16 %v434
  %v467 = vpack.c.b16 %v466, %v465
  %469 = vmatpush.bf16.msra.mxu0 %v168
  %470 = vmatpush.bf16.msra.mxu0 %v167
  %471 = vmatpush.bf16.msra.mxu0 %v166
  %472 = vmatpush.bf16.msra.mxu0 %v165
  %473 = vmatpush.bf16.msra.mxu0 %v164
  %474 = vmatpush.bf16.msra.mxu0 %v163
  %475 = vmatpush.bf16.msra.mxu0 %v162
  %476 = vmatpush.bf16.msra.mxu0 %v161
  %477 = vmatmul.bf16.gmra.mxu0 %v467
  %v478 = vpop.f32.mrf.mxu0
  %v479 = vadd.f32 0.0, %v478
  %v480 = vpop.f32.mrf.mxu0
  %v481 = vadd.f32 0.0, %v480
  %482 = vdwg.mxu0
  %v483 = vadd.f32 %v459, %v479
  %v484 = vadd.f32 %v461, %v481
  %s485 = sadd.s32 %s76, 3
  %p486 = scmp.gt.s32.totalorder %s485, 0
  %s487 = scalar_select %p486, 1, 0
  %s488 = scvt.s32.f32 %s487
  %v489 = vstv %s488
  %v490 = vmul.f32 %v489, %v70
  %v492 = vperm.slane %v490, 0
  %v494 = vadd.f32 %v483, %v492
  %v495 = vadd.f32 %v484, %v492
  %v496 = vmul.f32 %v423, %v204
  %v497 = vmul.f32 %v424, %v204
  %v498 = vmul.f32 %v209, %v494
  %v499 = vmul.f32 %v209, %v495
  %v500 = vadd.f32 %v496, %v498
  %v501 = vadd.f32 %v497, %v499
  %v502 = vmul.f32 %v429, 1.8
  %v503 = vmul.f32 %v430, 1.8
  %v504 = vadd.f32 %v502, 0.01
  %v505 = vadd.f32 %v503, 0.01
  %v506 = vsub.f32 %v500, %v504
  %v507 = vsub.f32 %v501, %v505
  %vm508 = vcmp.ge.f32.partialorder %v506, 0.0
  %vm509 = vcmp.ge.f32.partialorder %v507, 0.0
  %v510 = vsel %vm508, 1, 0
  %v511 = vsel %vm509, 1, 0
  %v512 = vcvt.s32.f32 %v510
  %v513 = vcvt.s32.f32 %v511
  %v514 = vmul.f32 %v512, %v504
  %v515 = vmul.f32 %v513, %v505
  %v516 = vsub.f32 %v500, %v514
  %v517 = vsub.f32 %v501, %v515
  %v518 = vmul.f32 %v232, %v429
  %v519 = vmul.f32 %v232, %v430
  %v520 = vmul.f32 %v237, %v512
  %v521 = vmul.f32 %v237, %v513
  %v522 = vadd.f32 %v518, %v520
  %v523 = vadd.f32 %v519, %v521
  %v524 = vmul.f32 %v512, %v244
  %v525 = vmul.f32 %v513, %v244
  %v526 = vpack.c.bf16 %v524, %v524
  %v527 = vpack.c.bf16 %v525, %v525
  %s528 = scalar_lea.vmem %s10, 24
  %529 = vst [vmem:[%s528] sm:$0xf] %v526
  %530 = vst [vmem:[%s528 + $0x4] sm:$0xf] %v527
  %s531 = scalar_lea.vmem %s0, 32
  %v532 = vld [vmem:[%s531] sm:$0xf]
  %v533 = vld [vmem:[%s531 + $0x4] sm:$0xf]
  %v536 = vunpack.c.l.b16 %v532
  %v537 = vunpack.c.l.b16 %v533
  %v538 = vpack.c.b16 %v537, %v536
  %v540 = vsel %vm105, %v538, 0
  %542 = vmatpush.bf16.msra.mxu0 0
  %543 = vmatpush.bf16.msra.mxu0 0
  %544 = vmatpush.bf16.msra.mxu0 0
  %545 = vmatpush.bf16.msra.mxu0 0
  %546 = vmatpush.bf16.msra.mxu0 0
  %547 = vmatpush.bf16.msra.mxu0 0
  %548 = vmatpush.bf16.msra.mxu0 %v102
  %549 = vmatpush.bf16.msra.mxu0 %v101
  %550 = vmatmul.bf16.gmra.mxu0 %v540
  %v551 = vpop.f32.mrf.mxu0
  %v552 = vadd.f32 %v86, %v551
  %v553 = vpop.f32.mrf.mxu0
  %v554 = vadd.f32 %v86, %v553
  %555 = vdwg.mxu0
  %v558 = vunpack.c.l.b16 %v526
  %v559 = vunpack.c.l.b16 %v527
  %v560 = vpack.c.b16 %v559, %v558
  %562 = vmatpush.bf16.msra.mxu0 %v168
  %563 = vmatpush.bf16.msra.mxu0 %v167
  %564 = vmatpush.bf16.msra.mxu0 %v166
  %565 = vmatpush.bf16.msra.mxu0 %v165
  %566 = vmatpush.bf16.msra.mxu0 %v164
  %567 = vmatpush.bf16.msra.mxu0 %v163
  %568 = vmatpush.bf16.msra.mxu0 %v162
  %569 = vmatpush.bf16.msra.mxu0 %v161
  %570 = vmatmul.bf16.gmra.mxu0 %v560
  %v571 = vpop.f32.mrf.mxu0
  %v572 = vadd.f32 0.0, %v571
  %v573 = vpop.f32.mrf.mxu0
  %v574 = vadd.f32 0.0, %v573
  %575 = vdwg.mxu0
  %v576 = vadd.f32 %v552, %v572
  %v577 = vadd.f32 %v554, %v574
  %s578 = sadd.s32 %s76, 4
  %p579 = scmp.gt.s32.totalorder %s578, 0
  %s580 = scalar_select %p579, 1, 0
  %s581 = scvt.s32.f32 %s580
  %v582 = vstv %s581
  %v583 = vmul.f32 %v582, %v70
  %v585 = vperm.slane %v583, 0
  %v587 = vadd.f32 %v576, %v585
  %v588 = vadd.f32 %v577, %v585
  %v589 = vmul.f32 %v516, %v204
  %v590 = vmul.f32 %v517, %v204
  %v591 = vmul.f32 %v209, %v587
  %v592 = vmul.f32 %v209, %v588
  %v593 = vadd.f32 %v589, %v591
  %v594 = vadd.f32 %v590, %v592
  %v595 = vmul.f32 %v522, 1.8
  %v596 = vmul.f32 %v523, 1.8
  %v597 = vadd.f32 %v595, 0.01
  %v598 = vadd.f32 %v596, 0.01
  %v599 = vsub.f32 %v593, %v597
  %v600 = vsub.f32 %v594, %v598
  %vm601 = vcmp.ge.f32.partialorder %v599, 0.0
  %vm602 = vcmp.ge.f32.partialorder %v600, 0.0
  %v603 = vsel %vm601, 1, 0
  %v604 = vsel %vm602, 1, 0
  %v605 = vcvt.s32.f32 %v603
  %v606 = vcvt.s32.f32 %v604
  %v607 = vmul.f32 %v605, %v597
  %v608 = vmul.f32 %v606, %v598
  %v609 = vsub.f32 %v593, %v607
  %v610 = vsub.f32 %v594, %v608
  %v611 = vmul.f32 %v232, %v522
  %v612 = vmul.f32 %v232, %v523
  %v613 = vmul.f32 %v237, %v605
  %v614 = vmul.f32 %v237, %v606
  %v615 = vadd.f32 %v611, %v613
  %v616 = vadd.f32 %v612, %v614
  %v617 = vmul.f32 %v605, %v244
  %v618 = vmul.f32 %v606, %v244
  %v619 = vpack.c.bf16 %v617, %v617
  %v620 = vpack.c.bf16 %v618, %v618
  %s621 = scalar_lea.vmem %s10, 32
  %622 = vst [vmem:[%s621] sm:$0xf] %v619
  %623 = vst [vmem:[%s621 + $0x4] sm:$0xf] %v620
  %s624 = scalar_lea.vmem %s0, 40
  %v625 = vld [vmem:[%s624] sm:$0xf]
  %v626 = vld [vmem:[%s624 + $0x4] sm:$0xf]
  %v629 = vunpack.c.l.b16 %v625
  %v630 = vunpack.c.l.b16 %v626
  %v631 = vpack.c.b16 %v630, %v629
  %v633 = vsel %vm105, %v631, 0
  %635 = vmatpush.bf16.msra.mxu0 0
  %636 = vmatpush.bf16.msra.mxu0 0
  %637 = vmatpush.bf16.msra.mxu0 0
  %638 = vmatpush.bf16.msra.mxu0 0
  %639 = vmatpush.bf16.msra.mxu0 0
  %640 = vmatpush.bf16.msra.mxu0 0
  %641 = vmatpush.bf16.msra.mxu0 %v102
  %642 = vmatpush.bf16.msra.mxu0 %v101
  %643 = vmatmul.bf16.gmra.mxu0 %v633
  %v644 = vpop.f32.mrf.mxu0
  %v645 = vadd.f32 %v86, %v644
  %v646 = vpop.f32.mrf.mxu0
  %v647 = vadd.f32 %v86, %v646
  %648 = vdwg.mxu0
  %v651 = vunpack.c.l.b16 %v619
  %v652 = vunpack.c.l.b16 %v620
  %v653 = vpack.c.b16 %v652, %v651
  %655 = vmatpush.bf16.msra.mxu0 %v168
  %656 = vmatpush.bf16.msra.mxu0 %v167
  %657 = vmatpush.bf16.msra.mxu0 %v166
  %658 = vmatpush.bf16.msra.mxu0 %v165
  %659 = vmatpush.bf16.msra.mxu0 %v164
  %660 = vmatpush.bf16.msra.mxu0 %v163
  %661 = vmatpush.bf16.msra.mxu0 %v162
  %662 = vmatpush.bf16.msra.mxu0 %v161
  %663 = vmatmul.bf16.gmra.mxu0 %v653
  %v664 = vpop.f32.mrf.mxu0
  %v665 = vadd.f32 0.0, %v664
  %v666 = vpop.f32.mrf.mxu0
  %v667 = vadd.f32 0.0, %v666
  %668 = vdwg.mxu0
  %v669 = vadd.f32 %v645, %v665
  %v670 = vadd.f32 %v647, %v667
  %s671 = sadd.s32 %s76, 5
  %p672 = scmp.gt.s32.totalorder %s671, 0
  %s673 = scalar_select %p672, 1, 0
  %s674 = scvt.s32.f32 %s673
  %v675 = vstv %s674
  %v676 = vmul.f32 %v675, %v70
  %v678 = vperm.slane %v676, 0
  %v680 = vadd.f32 %v669, %v678
  %v681 = vadd.f32 %v670, %v678
  %v682 = vmul.f32 %v609, %v204
  %v683 = vmul.f32 %v610, %v204
  %v684 = vmul.f32 %v209, %v680
  %v685 = vmul.f32 %v209, %v681
  %v686 = vadd.f32 %v682, %v684
  %v687 = vadd.f32 %v683, %v685
  %v688 = vmul.f32 %v615, 1.8
  %v689 = vmul.f32 %v616, 1.8
  %v690 = vadd.f32 %v688, 0.01
  %v691 = vadd.f32 %v689, 0.01
  %v692 = vsub.f32 %v686, %v690
  %v693 = vsub.f32 %v687, %v691
  %vm694 = vcmp.ge.f32.partialorder %v692, 0.0
  %vm695 = vcmp.ge.f32.partialorder %v693, 0.0
  %v696 = vsel %vm694, 1, 0
  %v697 = vsel %vm695, 1, 0
  %v698 = vcvt.s32.f32 %v696
  %v699 = vcvt.s32.f32 %v697
  %v700 = vmul.f32 %v698, %v690
  %v701 = vmul.f32 %v699, %v691
  %v702 = vsub.f32 %v686, %v700
  %v703 = vsub.f32 %v687, %v701
  %v704 = vmul.f32 %v232, %v615
  %v705 = vmul.f32 %v232, %v616
  %v706 = vmul.f32 %v237, %v698
  %v707 = vmul.f32 %v237, %v699
  %v708 = vadd.f32 %v704, %v706
  %v709 = vadd.f32 %v705, %v707
  %v710 = vmul.f32 %v698, %v244
  %v711 = vmul.f32 %v699, %v244
  %v712 = vpack.c.bf16 %v710, %v710
  %v713 = vpack.c.bf16 %v711, %v711
  %s714 = scalar_lea.vmem %s10, 40
  %715 = vst [vmem:[%s714] sm:$0xf] %v712
  %716 = vst [vmem:[%s714 + $0x4] sm:$0xf] %v713
  %s717 = scalar_lea.vmem %s0, 48
  %v718 = vld [vmem:[%s717] sm:$0xf]
  %v719 = vld [vmem:[%s717 + $0x4] sm:$0xf]
  %v722 = vunpack.c.l.b16 %v718
  %v723 = vunpack.c.l.b16 %v719
  %v724 = vpack.c.b16 %v723, %v722
  %v726 = vsel %vm105, %v724, 0
  %728 = vmatpush.bf16.msra.mxu0 0
  %729 = vmatpush.bf16.msra.mxu0 0
  %730 = vmatpush.bf16.msra.mxu0 0
  %731 = vmatpush.bf16.msra.mxu0 0
  %732 = vmatpush.bf16.msra.mxu0 0
  %733 = vmatpush.bf16.msra.mxu0 0
  %734 = vmatpush.bf16.msra.mxu0 %v102
  %735 = vmatpush.bf16.msra.mxu0 %v101
  %736 = vmatmul.bf16.gmra.mxu0 %v726
  %v737 = vpop.f32.mrf.mxu0
  %v738 = vadd.f32 %v86, %v737
  %v739 = vpop.f32.mrf.mxu0
  %v740 = vadd.f32 %v86, %v739
  %741 = vdwg.mxu0
  %v744 = vunpack.c.l.b16 %v712
  %v745 = vunpack.c.l.b16 %v713
  %v746 = vpack.c.b16 %v745, %v744
  %748 = vmatpush.bf16.msra.mxu0 %v168
  %749 = vmatpush.bf16.msra.mxu0 %v167
  %750 = vmatpush.bf16.msra.mxu0 %v166
  %751 = vmatpush.bf16.msra.mxu0 %v165
  %752 = vmatpush.bf16.msra.mxu0 %v164
  %753 = vmatpush.bf16.msra.mxu0 %v163
  %754 = vmatpush.bf16.msra.mxu0 %v162
  %755 = vmatpush.bf16.msra.mxu0 %v161
  %756 = vmatmul.bf16.gmra.mxu0 %v746
  %v757 = vpop.f32.mrf.mxu0
  %v758 = vadd.f32 0.0, %v757
  %v759 = vpop.f32.mrf.mxu0
  %v760 = vadd.f32 0.0, %v759
  %761 = vdwg.mxu0
  %v762 = vadd.f32 %v738, %v758
  %v763 = vadd.f32 %v740, %v760
  %s764 = sadd.s32 %s76, 6
  %p765 = scmp.gt.s32.totalorder %s764, 0
  %s766 = scalar_select %p765, 1, 0
  %s767 = scvt.s32.f32 %s766
  %v768 = vstv %s767
  %v769 = vmul.f32 %v768, %v70
  %v771 = vperm.slane %v769, 0
  %v773 = vadd.f32 %v762, %v771
  %v774 = vadd.f32 %v763, %v771
  %v775 = vmul.f32 %v702, %v204
  %v776 = vmul.f32 %v703, %v204
  %v777 = vmul.f32 %v209, %v773
  %v778 = vmul.f32 %v209, %v774
  %v779 = vadd.f32 %v775, %v777
  %v780 = vadd.f32 %v776, %v778
  %v781 = vmul.f32 %v708, 1.8
  %v782 = vmul.f32 %v709, 1.8
  %v783 = vadd.f32 %v781, 0.01
  %v784 = vadd.f32 %v782, 0.01
  %v785 = vsub.f32 %v779, %v783
  %v786 = vsub.f32 %v780, %v784
  %vm787 = vcmp.ge.f32.partialorder %v785, 0.0
  %vm788 = vcmp.ge.f32.partialorder %v786, 0.0
  %v789 = vsel %vm787, 1, 0
  %v790 = vsel %vm788, 1, 0
  %v791 = vcvt.s32.f32 %v789
  %v792 = vcvt.s32.f32 %v790
  %v793 = vmul.f32 %v791, %v783
  %v794 = vmul.f32 %v792, %v784
  %v795 = vsub.f32 %v779, %v793
  %v796 = vsub.f32 %v780, %v794
  %v797 = vmul.f32 %v232, %v708
  %v798 = vmul.f32 %v232, %v709
  %v799 = vmul.f32 %v237, %v791
  %v800 = vmul.f32 %v237, %v792
  %v801 = vadd.f32 %v797, %v799
  %v802 = vadd.f32 %v798, %v800
  %v803 = vmul.f32 %v791, %v244
  %v804 = vmul.f32 %v792, %v244
  %v805 = vpack.c.bf16 %v803, %v803
  %v806 = vpack.c.bf16 %v804, %v804
  %s807 = scalar_lea.vmem %s10, 48
  %808 = vst [vmem:[%s807] sm:$0xf] %v805
  %809 = vst [vmem:[%s807 + $0x4] sm:$0xf] %v806
  %s810 = scalar_lea.vmem %s0, 56
  %v811 = vld [vmem:[%s810] sm:$0xf]
  %v812 = vld [vmem:[%s810 + $0x4] sm:$0xf]
  %v815 = vunpack.c.l.b16 %v811
  %v816 = vunpack.c.l.b16 %v812
  %v817 = vpack.c.b16 %v816, %v815
  %v819 = vsel %vm105, %v817, 0
  %821 = vmatpush.bf16.msra.mxu0 0
  %822 = vmatpush.bf16.msra.mxu0 0
  %823 = vmatpush.bf16.msra.mxu0 0
  %824 = vmatpush.bf16.msra.mxu0 0
  %825 = vmatpush.bf16.msra.mxu0 0
  %826 = vmatpush.bf16.msra.mxu0 0
  %827 = vmatpush.bf16.msra.mxu0 %v102
  %828 = vmatpush.bf16.msra.mxu0 %v101
  %829 = vmatmul.bf16.gmra.mxu0 %v819
  %v830 = vpop.f32.mrf.mxu0
  %v831 = vadd.f32 %v86, %v830
  %v832 = vpop.f32.mrf.mxu0
  %v833 = vadd.f32 %v86, %v832
  %834 = vdwg.mxu0
  %v837 = vunpack.c.l.b16 %v805
  %v838 = vunpack.c.l.b16 %v806
  %v839 = vpack.c.b16 %v838, %v837
  %841 = vmatpush.bf16.msra.mxu0 %v168
  %842 = vmatpush.bf16.msra.mxu0 %v167
  %843 = vmatpush.bf16.msra.mxu0 %v166
  %844 = vmatpush.bf16.msra.mxu0 %v165
  %845 = vmatpush.bf16.msra.mxu0 %v164
  %846 = vmatpush.bf16.msra.mxu0 %v163
  %847 = vmatpush.bf16.msra.mxu0 %v162
  %848 = vmatpush.bf16.msra.mxu0 %v161
  %849 = vmatmul.bf16.gmra.mxu0 %v839
  %v850 = vpop.f32.mrf.mxu0
  %v851 = vadd.f32 0.0, %v850
  %v852 = vpop.f32.mrf.mxu0
  %v853 = vadd.f32 0.0, %v852
  %854 = vdwg.mxu0
  %v855 = vadd.f32 %v831, %v851
  %v856 = vadd.f32 %v833, %v853
  %s857 = sadd.s32 %s76, 7
  %p858 = scmp.gt.s32.totalorder %s857, 0
  %s859 = scalar_select %p858, 1, 0
  %s860 = scvt.s32.f32 %s859
  %v861 = vstv %s860
  %v862 = vmul.f32 %v861, %v70
  %v864 = vperm.slane %v862, 0
  %v866 = vadd.f32 %v855, %v864
  %v867 = vadd.f32 %v856, %v864
  %v868 = vmul.f32 %v795, %v204
  %v869 = vmul.f32 %v796, %v204
  %v870 = vmul.f32 %v209, %v866
  %v871 = vmul.f32 %v209, %v867
  %v872 = vadd.f32 %v868, %v870
  %v873 = vadd.f32 %v869, %v871
  %v874 = vmul.f32 %v801, 1.8
  %v875 = vmul.f32 %v802, 1.8
  %v876 = vadd.f32 %v874, 0.01
  %v877 = vadd.f32 %v875, 0.01
  %v878 = vsub.f32 %v872, %v876
  %v879 = vsub.f32 %v873, %v877
  %vm880 = vcmp.ge.f32.partialorder %v878, 0.0
  %vm881 = vcmp.ge.f32.partialorder %v879, 0.0
  %v882 = vsel %vm880, 1, 0
  %v883 = vsel %vm881, 1, 0
  %v884 = vcvt.s32.f32 %v882
  %v885 = vcvt.s32.f32 %v883
  %v886 = vmul.f32 %v884, %v876
  %v887 = vmul.f32 %v885, %v877
  %v888 = vsub.f32 %v872, %v886
  %v889 = vsub.f32 %v873, %v887
  %v890 = vmul.f32 %v232, %v801
  %v891 = vmul.f32 %v232, %v802
  %v892 = vmul.f32 %v237, %v884
  %v893 = vmul.f32 %v237, %v885
  %v894 = vadd.f32 %v890, %v892
  %v895 = vadd.f32 %v891, %v893
  %v896 = vmul.f32 %v884, %v244
  %v897 = vmul.f32 %v885, %v244
  %v898 = vpack.c.bf16 %v896, %v896
  %v899 = vpack.c.bf16 %v897, %v897
  %s900 = scalar_lea.vmem %s10, 56
  %901 = vst [vmem:[%s900] sm:$0xf] %v898
  %902 = vst [vmem:[%s900 + $0x4] sm:$0xf] %v899
  %903 = vst [vmem:[%s11] sm:$0xff] %v888
  %904 = vst [vmem:[%s11 + $0x8] sm:$0xff] %v889
  %905 = vst [vmem:[%s12] sm:$0xff] %v894
  %906 = vst [vmem:[%s12 + $0x8] sm:$0xff] %v895
  %907 = vst [vmem:[#allocation2] sm:$0xf] %v898
  %908 = vst [vmem:[#allocation2 + $0x4] sm:$0xf] %v899
  // Predicated region
  $region46: #{eib_forward_sequence.1} parent=0 // pred_check
    _
  $region47: #{eib_forward_sequence.1} parent=0 // pred_check_branch
    %910 = sbr.rel (0) target = $region49
  $region48: #{eib_forward_sequence.1} parent=0 // pred_region
    _
  $region49: #{eib_forward_sequence.1} parent=0 // pred_fallthru
    _
  // Predicated region
  $region50: #{eib_forward_sequence.1} parent=0 // pred_check
    _
  $region51: #{eib_forward_sequence.1} parent=0 // pred_check_branch
    %912 = sbr.rel (0) target = $region53
  $region52: #{eib_forward_sequence.1} parent=0 // pred_region
    _
  $region53: #{eib_forward_sequence.1} parent=0 // pred_fallthru
    _
  // Predicated region
  $region54: #{eib_forward_sequence.1} parent=0 // pred_check
    _
  $region55: #{eib_forward_sequence.1} parent=0 // pred_check_branch
    %914 = sbr.rel (0) target = $region57
  $region56: #{eib_forward_sequence.1} parent=0 // pred_region
    _
  $region57: #{eib_forward_sequence.1} parent=0 // pred_fallthru
    _
  // Predicated region
  $region58: #{eib_forward_sequence.1} parent=0 // pred_check
    _
  $region59: #{eib_forward_sequence.1} parent=0 // pred_check_branch
    %916 = sbr.rel (0) target = $region61
  $region60: #{eib_forward_sequence.1} parent=0 // pred_region
    _
  $region61: #{eib_forward_sequence.1} parent=0 // pred_fallthru
    _
  // Predicated region
  $region62: #{eib_forward_sequence.1} parent=0 // pred_check
    _
  $region63: #{eib_forward_sequence.1} parent=0 // pred_check_branch
    %918 = sbr.rel (0) target = $region65
  $region64: #{eib_forward_sequence.1} parent=0 // pred_region
    _
  $region65: #{eib_forward_sequence.1} parent=0 // pred_fallthru
    _
  // Predicated region
  $region66: #{eib_forward_sequence.1} parent=0 // pred_check
    _
  $region67: #{eib_forward_sequence.1} parent=0 // pred_check_branch
    %920 = sbr.rel (0) target = $region69
  $region68: #{eib_forward_sequence.1} parent=0 // pred_region
    _
  $region69: #{eib_forward_sequence.1} parent=0 // pred_fallthru
    _

</llo_original>
